<compile_context>
chip_gen: v7x
topology: tpu7x:2x2x1
jax: 0.10.0
libtpu: 0.0.40
codegen_flags: <defaults>
</compile_context>

<pallas_src>
import jax
import jax.numpy as jnp
from jax.experimental import pallas as pl
from jax.experimental.pallas import tpu as pltpu

INPUT_DIMS = 784
HIDDEN_DIMS = 128
OUTPUT_DIMS = 10
NUM_HIDDEN_LAYERS = 7          # layer1..layer7 (Linear+ReLU), then output Linear

LANE = 128
SUBLANE_PACK = 16              # bf16 packs 16 rows per sublane-pair
OUTPUT_PAD = LANE              # 128 (sliced back to 10 in the wrapper)
PARAM_DTYPE = jnp.bfloat16     # MXU input dtype; accumulation is f32


def _round_up(x, m):
    return ((x + m - 1) // m) * m


def _cdiv(x, m):
    return (x + m - 1) // m


def mlp_kernel(x_ref, w1_ref, wh_ref, bh_ref, wo_ref, bo_ref, o_ref):
    """One batch tile: 7x (Linear+ReLU) + output Linear, weights VMEM-resident.

    The tile is optionally split into two independent row-chains so the MXU
    drain -> VPU epilogue -> MXU push bubble of one chain overlaps the other.
    """
    tb = x_ref.shape[0]
    n_chains = 2 if (tb >= 64 and tb % 32 == 0) else 1
    rows = tb // n_chains

    # Layer 1: (rows, 784) @ (784, 128)  -- K is lane-padded internally by Mosaic.
    b1 = bh_ref[pl.ds(0, 1), :]                                   # (1,128) f32
    hs = []
    for c in range(n_chains):
        xc = x_ref[pl.ds(c * rows, rows), :]
        acc = jnp.dot(xc, w1_ref[...], preferred_element_type=jnp.float32)
        hs.append(jnp.maximum(acc + b1, 0.0).astype(PARAM_DTYPE))

    # Layers 2..7: (rows, 128) @ (128, 128), statically unrolled, chains interleaved.
    for layer in range(NUM_HIDDEN_LAYERS - 1):
        w = wh_ref[layer]
        b = bh_ref[pl.ds(layer + 1, 1), :]
        accs = [jnp.dot(h, w, preferred_element_type=jnp.float32) for h in hs]
        hs = [jnp.maximum(a + b, 0.0).astype(PARAM_DTYPE) for a in accs]

    # Output layer (lane-padded to 128 -> full-width unmasked stores).
    for c in range(n_chains):
        out = jnp.dot(hs[c], wo_ref[...], preferred_element_type=jnp.float32)
        out = out + bo_ref[...]
        o_ref[pl.ds(c * rows, rows), :] = out.astype(o_ref.dtype)


def init_params(key):
    """Matches the PyTorch module init: W ~ N(0, 0.05), b = 0.

    Packed layout:
      w1 : (784, 128)       bf16  (unpadded; 784 == full dim, no HBM pad needed)
      wh : (6, 128, 128)    bf16  (layers 2..7)
      bh : (7, 128)         f32   (layers 1..7)
      wo : (128, 128)       bf16, cols 10:128 zero
      bo : (1, 128)         f32,  cols 10:128 zero
    """
    k1, k2, k3 = jax.random.split(key, 3)

    w1 = (0.05 * jax.random.normal(k1, (INPUT_DIMS, HIDDEN_DIMS), dtype=jnp.float32)
          ).astype(PARAM_DTYPE)

    wh = (0.05 * jax.random.normal(
        k2, (NUM_HIDDEN_LAYERS - 1, HIDDEN_DIMS, HIDDEN_DIMS), dtype=jnp.float32)
          ).astype(PARAM_DTYPE)

    bh = jnp.zeros((NUM_HIDDEN_LAYERS, HIDDEN_DIMS), dtype=jnp.float32)

    wo = 0.05 * jax.random.normal(k3, (HIDDEN_DIMS, OUTPUT_DIMS), dtype=jnp.float32)
    wo = jnp.pad(wo, ((0, 0), (0, OUTPUT_PAD - OUTPUT_DIMS))).astype(PARAM_DTYPE)

    bo = jnp.zeros((1, OUTPUT_PAD), dtype=jnp.float32)

    return (w1, wh, bh, wo, bo)


def mlp_forward(x_nchw, params, tile_b=1024):
    w1, wh, bh, wo, bo = params
    B = x_nchw.shape[0]

    # nn.Flatten() + single cast to bf16 (one pass over x; no feature padding).
    x = x_nchw.reshape(B, -1).astype(PARAM_DTYPE)
    assert x.shape[1] == INPUT_DIMS

    # Batch tiling:
    #  - tiles are multiples of 16 (bf16 sublane packing)
    #  - for non-tiny batches pick n_steps >= 2 so the "parallel" grid axis can
    #    actually shard across v7x's two TensorCores
    #  - cap at tile_b (1024 default; x tile 2x1024x784 bf16 + intermediates is
    #    well under v7x's 32 MiB scoped VMEM)
    if B <= 2 * SUBLANE_PACK:
        TILE_B = _round_up(B, SUBLANE_PACK)
    else:
        n_steps = max(2, _cdiv(B, tile_b))
        TILE_B = min(tile_b, _round_up(_cdiv(B, n_steps), SUBLANE_PACK))
    B_pad = _round_up(B, TILE_B)
    if B_pad != B:
        # Padded rows compute garbage once biases are nonzero; they are sliced
        # off below (wasted work only, never wrong results).
        x = jnp.pad(x, ((0, B_pad - B), (0, 0)))

    grid = (B_pad // TILE_B,)

    param_bytes = sum(int(p.size) * p.dtype.itemsize for p in (w1, wh, bh, wo, bo))
    flops = 2 * B_pad * (
        INPUT_DIMS * HIDDEN_DIMS
        + (NUM_HIDDEN_LAYERS - 1) * HIDDEN_DIMS * HIDDEN_DIMS
        + HIDDEN_DIMS * OUTPUT_PAD
    )
    cost = pl.CostEstimate(
        flops=flops,
        transcendentals=0,
        bytes_accessed=int(x.size) * x.dtype.itemsize
        + B_pad * OUTPUT_PAD * 4
        + param_bytes,
    )

    out = pl.pallas_call(
        mlp_kernel,
        out_shape=jax.ShapeDtypeStruct((B_pad, OUTPUT_PAD), jnp.float32),
        grid_spec=pltpu.PrefetchScalarGridSpec(
            num_scalar_prefetch=0,
            grid=grid,
            in_specs=[
                pl.BlockSpec((TILE_B, INPUT_DIMS), lambda i: (i, 0)),          # x tile
                pl.BlockSpec((INPUT_DIMS, HIDDEN_DIMS), lambda i: (0, 0)),     # w1 (resident)
                pl.BlockSpec(
                    (NUM_HIDDEN_LAYERS - 1, HIDDEN_DIMS, HIDDEN_DIMS),
                    lambda i: (0, 0, 0),
                ),                                                             # hidden Ws
                pl.BlockSpec((NUM_HIDDEN_LAYERS, HIDDEN_DIMS), lambda i: (0, 0)),  # hidden bs
                pl.BlockSpec((HIDDEN_DIMS, OUTPUT_PAD), lambda i: (0, 0)),     # w_out
                pl.BlockSpec((1, OUTPUT_PAD), lambda i: (0, 0)),               # b_out
            ],
            out_specs=pl.BlockSpec((TILE_B, OUTPUT_PAD), lambda i: (i, 0)),
        ),
        compiler_params=pltpu.CompilerParams(
            dimension_semantics=("parallel",),
            vmem_limit_bytes=32 * 1024 * 1024,
        ),
        cost_estimate=cost,
    )(x, w1, wh, bh, wo, bo)

    # Strip batch + lane padding.
    return out[:B, :OUTPUT_DIMS]


def mlp_reference(x_nchw, params):
    """Pure-JAX reference mirroring the kernel math (bf16 MXU inputs, f32 acc)."""
    w1, wh, bh, wo, bo = params
    B = x_nchw.shape[0]
    x = x_nchw.reshape(B, -1).astype(PARAM_DTYPE)

    acc = jnp.dot(x, w1, preferred_element_type=jnp.float32) + bh[0:1]
    h = jnp.maximum(acc, 0.0).astype(PARAM_DTYPE)
    for layer in range(NUM_HIDDEN_LAYERS - 1):
        acc = jnp.dot(h, wh[layer], preferred_element_type=jnp.float32) + bh[layer + 1:layer + 2]
        h = jnp.maximum(acc, 0.0).astype(PARAM_DTYPE)
    out = jnp.dot(h, wo, preferred_element_type=jnp.float32) + bo
    return out[:, :OUTPUT_DIMS]


if __name__ == "__main__":
    key = jax.random.PRNGKey(0)
    key, xk = jax.random.split(key)

    # MNIST-like input: (batch=2, channels=1, 28, 28) -> flatten -> 784
    x = jax.random.normal(xk, (2, 1, 28, 28), dtype=jnp.float32)
    params = init_params(key)

    y = mlp_forward(x, params)
    jax.block_until_ready(y)

    y_ref = mlp_reference(x, params)
    assert y.shape == (2, OUTPUT_DIMS)
    assert jnp.allclose(y, y_ref, atol=2e-2, rtol=2e-2), (
        f"max abs err {jnp.max(jnp.abs(y - y_ref))}"
    )

    print("KERNEL_OK")
</pallas_src>

<mosaic_0001>
module attributes {stable_mosaic.version = 11 : i64} {
  func.func @mlp_kernel(%arg0: i32, %arg1: memref<16x784xbf16, #tpu.memory_space<vmem>>, %arg2: memref<784x128xbf16, #tpu.memory_space<vmem>>, %arg3: memref<6x128x128xbf16, #tpu.memory_space<vmem>>, %arg4: memref<7x128xf32, #tpu.memory_space<vmem>>, %arg5: memref<128x128xbf16, #tpu.memory_space<vmem>>, %arg6: memref<1x128xf32, #tpu.memory_space<vmem>>, %arg7: memref<16x128xf32, #tpu.memory_space<vmem>>) attributes {dimension_semantics = [#tpu.dimension_semantics<parallel>], iteration_bounds = array<i64: 1>, scalar_prefetch = 0 : i64, scratch_operands = 0 : i64, tpu.core_type = #tpu.core_type<tc>, window_params = [{transform_indices = @transform_0, window_bounds = array<i64: 16, 784>}, {pipeline_mode = #tpu.pipeline_mode<synchronous>, transform_indices = @transform_1, window_bounds = array<i64: 784, 128>}, {pipeline_mode = #tpu.pipeline_mode<synchronous>, transform_indices = @transform_2, window_bounds = array<i64: 6, 128, 128>}, {pipeline_mode = #tpu.pipeline_mode<synchronous>, transform_indices = @transform_3, window_bounds = array<i64: 7, 128>}, {pipeline_mode = #tpu.pipeline_mode<synchronous>, transform_indices = @transform_4, window_bounds = array<i64: 128, 128>}, {pipeline_mode = #tpu.pipeline_mode<synchronous>, transform_indices = @transform_5, window_bounds = array<i64: 1, 128>}, {transform_indices = @transform_6, window_bounds = array<i64: 16, 128>}]} {
    %c0 = arith.constant 0 : index
    %c0_0 = arith.constant 0 : index
    %0 = vector.load %arg4[%c0, %c0_0] : memref<7x128xf32, #tpu.memory_space<vmem>>, vector<1x128xf32>
    %c0_1 = arith.constant 0 : index
    %c0_2 = arith.constant 0 : index
    %1 = vector.load %arg1[%c0_1, %c0_2] : memref<16x784xbf16, #tpu.memory_space<vmem>>, vector<16x784xbf16>
    %c0_3 = arith.constant 0 : index
    %c0_4 = arith.constant 0 : index
    %2 = vector.load %arg2[%c0_3, %c0_4] : memref<784x128xbf16, #tpu.memory_space<vmem>>, vector<784x128xbf16>
    %cst = arith.constant dense<0.000000e+00> : vector<16x128xf32>
    %3 = tpu.matmul %1, %2, %cst {dimension_numbers = #tpu.dot_dimension_numbers<[1], [0], [0], [1], [0, 0, 1, 1], [], []>} : vector<16x784xbf16>, vector<784x128xbf16>, vector<16x128xf32> -> vector<16x128xf32>
    %4 = vector.broadcast %0 : vector<1x128xf32> to vector<16x128xf32>
    %5 = arith.addf %3, %4 : vector<16x128xf32>
    %cst_5 = arith.constant 0.000000e+00 : f32
    %6 = vector.broadcast %cst_5 : f32 to vector<16x128xf32>
    %7 = arith.maximumf %5, %6 : vector<16x128xf32>
    %8 = arith.truncf %7 : vector<16x128xf32> to vector<16x128xbf16>
    %c0_6 = arith.constant 0 : index
    %c0_7 = arith.constant 0 : index
    %c0_8 = arith.constant 0 : index
    %9 = vector.load %arg3[%c0_6, %c0_7, %c0_8] : memref<6x128x128xbf16, #tpu.memory_space<vmem>>, vector<1x128x128xbf16>
    %10 = vector.shape_cast %9 : vector<1x128x128xbf16> to vector<128x128xbf16>
    %c1 = arith.constant 1 : index
    %c0_9 = arith.constant 0 : index
    %11 = vector.load %arg4[%c1, %c0_9] : memref<7x128xf32, #tpu.memory_space<vmem>>, vector<1x128xf32>
    %cst_10 = arith.constant dense<0.000000e+00> : vector<16x128xf32>
    %12 = tpu.matmul %8, %10, %cst_10 {dimension_numbers = #tpu.dot_dimension_numbers<[1], [0], [0], [1], [0, 0, 1, 1], [], []>} : vector<16x128xbf16>, vector<128x128xbf16>, vector<16x128xf32> -> vector<16x128xf32>
    %13 = vector.broadcast %11 : vector<1x128xf32> to vector<16x128xf32>
    %14 = arith.addf %12, %13 : vector<16x128xf32>
    %cst_11 = arith.constant 0.000000e+00 : f32
    %15 = vector.broadcast %cst_11 : f32 to vector<16x128xf32>
    %16 = arith.maximumf %14, %15 : vector<16x128xf32>
    %17 = arith.truncf %16 : vector<16x128xf32> to vector<16x128xbf16>
    %c1_12 = arith.constant 1 : index
    %c0_13 = arith.constant 0 : index
    %c0_14 = arith.constant 0 : index
    %18 = vector.load %arg3[%c1_12, %c0_13, %c0_14] : memref<6x128x128xbf16, #tpu.memory_space<vmem>>, vector<1x128x128xbf16>
    %19 = vector.shape_cast %18 : vector<1x128x128xbf16> to vector<128x128xbf16>
    %c2 = arith.constant 2 : index
    %c0_15 = arith.constant 0 : index
    %20 = vector.load %arg4[%c2, %c0_15] : memref<7x128xf32, #tpu.memory_space<vmem>>, vector<1x128xf32>
    %cst_16 = arith.constant dense<0.000000e+00> : vector<16x128xf32>
    %21 = tpu.matmul %17, %19, %cst_16 {dimension_numbers = #tpu.dot_dimension_numbers<[1], [0], [0], [1], [0, 0, 1, 1], [], []>} : vector<16x128xbf16>, vector<128x128xbf16>, vector<16x128xf32> -> vector<16x128xf32>
    %22 = vector.broadcast %20 : vector<1x128xf32> to vector<16x128xf32>
    %23 = arith.addf %21, %22 : vector<16x128xf32>
    %cst_17 = arith.constant 0.000000e+00 : f32
    %24 = vector.broadcast %cst_17 : f32 to vector<16x128xf32>
    %25 = arith.maximumf %23, %24 : vector<16x128xf32>
    %26 = arith.truncf %25 : vector<16x128xf32> to vector<16x128xbf16>
    %c2_18 = arith.constant 2 : index
    %c0_19 = arith.constant 0 : index
    %c0_20 = arith.constant 0 : index
    %27 = vector.load %arg3[%c2_18, %c0_19, %c0_20] : memref<6x128x128xbf16, #tpu.memory_space<vmem>>, vector<1x128x128xbf16>
    %28 = vector.shape_cast %27 : vector<1x128x128xbf16> to vector<128x128xbf16>
    %c3 = arith.constant 3 : index
    %c0_21 = arith.constant 0 : index
    %29 = vector.load %arg4[%c3, %c0_21] : memref<7x128xf32, #tpu.memory_space<vmem>>, vector<1x128xf32>
    %cst_22 = arith.constant dense<0.000000e+00> : vector<16x128xf32>
    %30 = tpu.matmul %26, %28, %cst_22 {dimension_numbers = #tpu.dot_dimension_numbers<[1], [0], [0], [1], [0, 0, 1, 1], [], []>} : vector<16x128xbf16>, vector<128x128xbf16>, vector<16x128xf32> -> vector<16x128xf32>
    %31 = vector.broadcast %29 : vector<1x128xf32> to vector<16x128xf32>
    %32 = arith.addf %30, %31 : vector<16x128xf32>
    %cst_23 = arith.constant 0.000000e+00 : f32
    %33 = vector.broadcast %cst_23 : f32 to vector<16x128xf32>
    %34 = arith.maximumf %32, %33 : vector<16x128xf32>
    %35 = arith.truncf %34 : vector<16x128xf32> to vector<16x128xbf16>
    %c3_24 = arith.constant 3 : index
    %c0_25 = arith.constant 0 : index
    %c0_26 = arith.constant 0 : index
    %36 = vector.load %arg3[%c3_24, %c0_25, %c0_26] : memref<6x128x128xbf16, #tpu.memory_space<vmem>>, vector<1x128x128xbf16>
    %37 = vector.shape_cast %36 : vector<1x128x128xbf16> to vector<128x128xbf16>
    %c4 = arith.constant 4 : index
    %c0_27 = arith.constant 0 : index
    %38 = vector.load %arg4[%c4, %c0_27] : memref<7x128xf32, #tpu.memory_space<vmem>>, vector<1x128xf32>
    %cst_28 = arith.constant dense<0.000000e+00> : vector<16x128xf32>
    %39 = tpu.matmul %35, %37, %cst_28 {dimension_numbers = #tpu.dot_dimension_numbers<[1], [0], [0], [1], [0, 0, 1, 1], [], []>} : vector<16x128xbf16>, vector<128x128xbf16>, vector<16x128xf32> -> vector<16x128xf32>
    %40 = vector.broadcast %38 : vector<1x128xf32> to vector<16x128xf32>
    %41 = arith.addf %39, %40 : vector<16x128xf32>
    %cst_29 = arith.constant 0.000000e+00 : f32
    %42 = vector.broadcast %cst_29 : f32 to vector<16x128xf32>
    %43 = arith.maximumf %41, %42 : vector<16x128xf32>
    %44 = arith.truncf %43 : vector<16x128xf32> to vector<16x128xbf16>
    %c4_30 = arith.constant 4 : index
    %c0_31 = arith.constant 0 : index
    %c0_32 = arith.constant 0 : index
    %45 = vector.load %arg3[%c4_30, %c0_31, %c0_32] : memref<6x128x128xbf16, #tpu.memory_space<vmem>>, vector<1x128x128xbf16>
    %46 = vector.shape_cast %45 : vector<1x128x128xbf16> to vector<128x128xbf16>
    %c5 = arith.constant 5 : index
    %c0_33 = arith.constant 0 : index
    %47 = vector.load %arg4[%c5, %c0_33] : memref<7x128xf32, #tpu.memory_space<vmem>>, vector<1x128xf32>
    %cst_34 = arith.constant dense<0.000000e+00> : vector<16x128xf32>
    %48 = tpu.matmul %44, %46, %cst_34 {dimension_numbers = #tpu.dot_dimension_numbers<[1], [0], [0], [1], [0, 0, 1, 1], [], []>} : vector<16x128xbf16>, vector<128x128xbf16>, vector<16x128xf32> -> vector<16x128xf32>
    %49 = vector.broadcast %47 : vector<1x128xf32> to vector<16x128xf32>
    %50 = arith.addf %48, %49 : vector<16x128xf32>
    %cst_35 = arith.constant 0.000000e+00 : f32
    %51 = vector.broadcast %cst_35 : f32 to vector<16x128xf32>
    %52 = arith.maximumf %50, %51 : vector<16x128xf32>
    %53 = arith.truncf %52 : vector<16x128xf32> to vector<16x128xbf16>
    %c5_36 = arith.constant 5 : index
    %c0_37 = arith.constant 0 : index
    %c0_38 = arith.constant 0 : index
    %54 = vector.load %arg3[%c5_36, %c0_37, %c0_38] : memref<6x128x128xbf16, #tpu.memory_space<vmem>>, vector<1x128x128xbf16>
    %55 = vector.shape_cast %54 : vector<1x128x128xbf16> to vector<128x128xbf16>
    %c6 = arith.constant 6 : index
    %c0_39 = arith.constant 0 : index
    %56 = vector.load %arg4[%c6, %c0_39] : memref<7x128xf32, #tpu.memory_space<vmem>>, vector<1x128xf32>
    %cst_40 = arith.constant dense<0.000000e+00> : vector<16x128xf32>
    %57 = tpu.matmul %53, %55, %cst_40 {dimension_numbers = #tpu.dot_dimension_numbers<[1], [0], [0], [1], [0, 0, 1, 1], [], []>} : vector<16x128xbf16>, vector<128x128xbf16>, vector<16x128xf32> -> vector<16x128xf32>
    %58 = vector.broadcast %56 : vector<1x128xf32> to vector<16x128xf32>
    %59 = arith.addf %57, %58 : vector<16x128xf32>
    %cst_41 = arith.constant 0.000000e+00 : f32
    %60 = vector.broadcast %cst_41 : f32 to vector<16x128xf32>
    %61 = arith.maximumf %59, %60 : vector<16x128xf32>
    %62 = arith.truncf %61 : vector<16x128xf32> to vector<16x128xbf16>
    %c0_42 = arith.constant 0 : index
    %c0_43 = arith.constant 0 : index
    %63 = vector.load %arg5[%c0_42, %c0_43] : memref<128x128xbf16, #tpu.memory_space<vmem>>, vector<128x128xbf16>
    %cst_44 = arith.constant dense<0.000000e+00> : vector<16x128xf32>
    %64 = tpu.matmul %62, %63, %cst_44 {dimension_numbers = #tpu.dot_dimension_numbers<[1], [0], [0], [1], [0, 0, 1, 1], [], []>} : vector<16x128xbf16>, vector<128x128xbf16>, vector<16x128xf32> -> vector<16x128xf32>
    %c0_45 = arith.constant 0 : index
    %c0_46 = arith.constant 0 : index
    %65 = vector.load %arg6[%c0_45, %c0_46] : memref<1x128xf32, #tpu.memory_space<vmem>>, vector<1x128xf32>
    %66 = vector.broadcast %65 : vector<1x128xf32> to vector<16x128xf32>
    %67 = arith.addf %64, %66 : vector<16x128xf32>
    %c0_47 = arith.constant 0 : index
    %c0_48 = arith.constant 0 : index
    %68 = vector.load %arg7[%c0_47, %c0_48] : memref<16x128xf32, #tpu.memory_space<vmem>>, vector<16x128xf32>
    tpu.vector_store %arg7[%c0_47, %c0_48], %67 {strides = array<i32>} : memref<16x128xf32, #tpu.memory_space<vmem>>, vector<16x128xf32>,
    return
  }
  func.func @transform_0(%arg0: i32) -> (i32, i32) {
    %c0_i32 = arith.constant 0 : i32
    %c0_i32_0 = arith.constant 0 : i32
    return %arg0, %c0_i32 : i32, i32
  }
  func.func @transform_1(%arg0: i32) -> (i32, i32) {
    %c0_i32 = arith.constant 0 : i32
    %c0_i32_0 = arith.constant 0 : i32
    %c0_i32_1 = arith.constant 0 : i32
    return %c0_i32, %c0_i32_0 : i32, i32
  }
  func.func @transform_2(%arg0: i32) -> (i32, i32, i32) {
    %c0_i32 = arith.constant 0 : i32
    %c0_i32_0 = arith.constant 0 : i32
    %c0_i32_1 = arith.constant 0 : i32
    %c0_i32_2 = arith.constant 0 : i32
    return %c0_i32, %c0_i32_0, %c0_i32_1 : i32, i32, i32
  }
  func.func @transform_3(%arg0: i32) -> (i32, i32) {
    %c0_i32 = arith.constant 0 : i32
    %c0_i32_0 = arith.constant 0 : i32
    %c0_i32_1 = arith.constant 0 : i32
    return %c0_i32, %c0_i32_0 : i32, i32
  }
  func.func @transform_4(%arg0: i32) -> (i32, i32) {
    %c0_i32 = arith.constant 0 : i32
    %c0_i32_0 = arith.constant 0 : i32
    %c0_i32_1 = arith.constant 0 : i32
    return %c0_i32, %c0_i32_0 : i32, i32
  }
  func.func @transform_5(%arg0: i32) -> (i32, i32) {
    %c0_i32 = arith.constant 0 : i32
    %c0_i32_0 = arith.constant 0 : i32
    %c0_i32_1 = arith.constant 0 : i32
    return %c0_i32, %c0_i32_0 : i32, i32
  }
  func.func @transform_6(%arg0: i32) -> (i32, i32) {
    %c0_i32 = arith.constant 0 : i32
    %c0_i32_0 = arith.constant 0 : i32
    return %arg0, %c0_i32 : i32, i32
  }
}

</mosaic_0001>

<llo_original>
// kernel: tpu_custom_call.1
$region0: #{tpu_custom_call.1}
  #allocation0 [shape = 'u32[]', space=smem, size = 0x4, offset = 0x4, fixed_abs, tag = 'smem constant byte address 0x4 - core index']
  #allocation1 [shape = 'u32[144,128]{1,0:T(1,128)}', space=vmem, size = 0x12000, scoped, tag = 'internal scratch']
  %s0 = inlined_call_operand.hbm [shape: bf16[16,784], index: 0, kind: input, shape index: {}]
  %s1 = inlined_call_operand.hbm [shape: bf16[784,128], index: 1, kind: input, shape index: {}]
  %s2 = inlined_call_operand.hbm [shape: bf16[6,128,128], index: 2, kind: input, shape index: {}]
  %s3 = inlined_call_operand.vmem [shape: f32[7,128], index: 3, kind: input, shape index: {}]
  %s4 = inlined_call_operand.hbm [shape: bf16[128,128], index: 4, kind: input, shape index: {}]
  %s5 = inlined_call_operand.vmem [shape: f32[1,128], index: 5, kind: input, shape index: {}]
  %s6 = inlined_call_operand.hbm [shape: f32[16,128], index: 6, kind: output, shape index: {}]
  %s7 = sld [smem:[#allocation0]]
  $region50: #{tpu_custom_call.1} parent=0
    _
  %s9 = ssub.s32 1, %s7
  %s10 = scalar_select 0, %s9, %s7
  $region1: #{tpu_custom_call.1} parent=0
    #allocation2 [shape = 'u8[28672]{0}', space=vmem, size = 0x7000, scoped, tag = 'input window, operand 0, single buffered']
    #allocation3 [shape = 's32[1]{0}', space=sflag, size = 0x4, scoped, tag = 'scoped memory for tpu_custom_call.1']
    #allocation4 [shape = 's32[1]{0}', space=sflag, size = 0x4, scoped, tag = 'scoped memory for tpu_custom_call.1']
    #allocation5 [shape = 'u8[200704]{0}', space=vmem, size = 0x31000, scoped, tag = 'input window, operand 1, single buffered']
    #allocation6 [shape = 's32[1]{0}', space=sflag, size = 0x4, scoped, tag = 'scoped memory for tpu_custom_call.1']
    #allocation7 [shape = 'u8[196608]{0}', space=vmem, size = 0x30000, scoped, tag = 'input window, operand 2, single buffered']
    #allocation8 [shape = 'u8[32768]{0}', space=vmem, size = 0x8000, scoped, tag = 'input window, operand 4, single buffered']
    #allocation9 [shape = 's32[1]{0}', space=sflag, size = 0x4, scoped, tag = 'scoped memory for tpu_custom_call.1']
    #allocation10 [shape = 'u8[8192]{0}', space=vmem, size = 0x2000, scoped, tag = 'output window, operand 0, single buffered']
    %11 = vsyncpa [#allocation3], 0
    %12 = vsyncpa [#allocation6], 0
    %13 = vsyncpa [#allocation9], 0
    %14 = vsyncpa [#allocation4], 0
    // Predicated region
    $region2: #{tpu_custom_call.1} parent=1 // pred_check
      _
    $region3: #{tpu_custom_call.1} parent=1 // pred_check_branch
      %16 = sbr.rel (0) target = $region5
    $region4: #{tpu_custom_call.1} parent=1 // pred_region
      %s18 = ssub.s32 896, 896
      %19 = vsyncadd [#allocation3], %s18
      %s20 = sshll.u32 [#allocation2], 4
      %s21 = int_to_ptr.vmem [resolvable:$true] %s20
      %26 = dma.hbm_to_vmem [thread:$0]  %s0, 896, %s21, [#allocation3], 448, 448, 28
    $region5: #{tpu_custom_call.1} parent=1 // pred_fallthru
      _
    // Predicated region
    $region6: #{tpu_custom_call.1} parent=1 // pred_check
      _
    $region7: #{tpu_custom_call.1} parent=1 // pred_check_branch
      %28 = sbr.rel (0) target = $region9
    $region8: #{tpu_custom_call.1} parent=1 // pred_region
      %s30 = ssub.s32 6272, 6272
      %31 = vsyncadd [#allocation6], %s30
      %s32 = sshll.u32 [#allocation5], 4
      %s33 = int_to_ptr.vmem [resolvable:$true] %s32
      %38 = dma.hbm_to_vmem [thread:$0]  %s1, 6272, %s33, [#allocation6], 64, 64, 4
    $region9: #{tpu_custom_call.1} parent=1 // pred_fallthru
      _
    // Predicated region
    $region10: #{tpu_custom_call.1} parent=1 // pred_check
      _
    $region11: #{tpu_custom_call.1} parent=1 // pred_check_branch
      %40 = sbr.rel (0) target = $region13
    $region12: #{tpu_custom_call.1} parent=1 // pred_region
      %s42 = ssub.s32 6144, 6144
      %43 = vsyncadd [#allocation6], %s42
      %s44 = sshll.u32 [#allocation7], 4
      %s45 = int_to_ptr.vmem [resolvable:$true] %s44
      %50 = dma.hbm_to_vmem [thread:$0]  %s2, 6144, %s45, [#allocation6], 64, 64, 4
    $region13: #{tpu_custom_call.1} parent=1 // pred_fallthru
      _
    // Predicated region
    $region14: #{tpu_custom_call.1} parent=1 // pred_check
      _
    $region15: #{tpu_custom_call.1} parent=1 // pred_check_branch
      %52 = sbr.rel (0) target = $region17
    $region16: #{tpu_custom_call.1} parent=1 // pred_region
      _
    $region17: #{tpu_custom_call.1} parent=1 // pred_fallthru
      _
    // Predicated region
    $region18: #{tpu_custom_call.1} parent=1 // pred_check
      _
    $region19: #{tpu_custom_call.1} parent=1 // pred_check_branch
      %54 = sbr.rel (0) target = $region21
    $region20: #{tpu_custom_call.1} parent=1 // pred_region
      %s56 = ssub.s32 1024, 1024
      %57 = vsyncadd [#allocation9], %s56
      %s58 = sshll.u32 [#allocation8], 4
      %s59 = int_to_ptr.vmem [resolvable:$true] %s58
      %64 = dma.hbm_to_vmem [thread:$0]  %s4, 1024, %s59, [#allocation9], 64, 64, 4
    $region21: #{tpu_custom_call.1} parent=1 // pred_fallthru
      _
    // Predicated region
    $region22: #{tpu_custom_call.1} parent=1 // pred_check
      _
    $region23: #{tpu_custom_call.1} parent=1 // pred_check_branch
      %66 = sbr.rel (0) target = $region25
    $region24: #{tpu_custom_call.1} parent=1 // pred_region
      _
    $region25: #{tpu_custom_call.1} parent=1 // pred_fallthru
      _
    // Predicated region
    $region26: #{tpu_custom_call.1} parent=1 // pred_check
      _
    $region27: #{tpu_custom_call.1} parent=1 // pred_check_branch
      %68 = sbr.rel (0) target = $region29
    $region28: #{tpu_custom_call.1} parent=1 // pred_region
      %69 = dma.done [#allocation3], 896
    $region29: #{tpu_custom_call.1} parent=1 // pred_fallthru
      _
    // Predicated region
    $region30: #{tpu_custom_call.1} parent=1 // pred_check
      _
    $region31: #{tpu_custom_call.1} parent=1 // pred_check_branch
      %71 = sbr.rel (0) target = $region33
    $region32: #{tpu_custom_call.1} parent=1 // pred_region
      %72 = dma.done [#allocation6], 6272
    $region33: #{tpu_custom_call.1} parent=1 // pred_fallthru
      _
    // Predicated region
    $region34: #{tpu_custom_call.1} parent=1 // pred_check
      _
    $region35: #{tpu_custom_call.1} parent=1 // pred_check_branch
      %74 = sbr.rel (0) target = $region37
    $region36: #{tpu_custom_call.1} parent=1 // pred_region
      %75 = dma.done [#allocation6], 6144
    $region37: #{tpu_custom_call.1} parent=1 // pred_fallthru
      _
    // Predicated region
    $region38: #{tpu_custom_call.1} parent=1 // pred_check
      _
    $region39: #{tpu_custom_call.1} parent=1 // pred_check_branch
      %77 = sbr.rel (0) target = $region41
    $region40: #{tpu_custom_call.1} parent=1 // pred_region
      %78 = dma.done [#allocation9], 1024
    $region41: #{tpu_custom_call.1} parent=1 // pred_fallthru
      _
    %v80 = vld [vmem:[%s3] sm:$0x1]
    %v81 = vld [vmem:[#allocation2] sm:$0xff]
    %v82 = vld [vmem:[#allocation2 + $0x8] sm:$0xff]
    %v83 = vld [vmem:[#allocation2 + $0x10] sm:$0xff]
    %v84 = vld [vmem:[#allocation2 + $0x18] sm:$0xf]
    %v85 = vld [vmem:[#allocation2 + $0x1c] sm:$0xff]
    %v86 = vld [vmem:[#allocation2 + $0x24] sm:$0xff]
    %v87 = vld [vmem:[#allocation2 + $0x2c] sm:$0xff]
    %v88 = vld [vmem:[#allocation2 + $0x34] sm:$0xf]
    %v89 = vld [vmem:[#allocation5] sm:$0xf]
    %v90 = vld [vmem:[#allocation5 + $0x4] sm:$0xf]
    %v91 = vld [vmem:[#allocation5 + $0x8] sm:$0xf]
    %v92 = vld [vmem:[#allocation5 + $0xc] sm:$0xf]
    %v93 = vld [vmem:[#allocation5 + $0x10] sm:$0xf]
    %v94 = vld [vmem:[#allocation5 + $0x14] sm:$0xf]
    %v95 = vld [vmem:[#allocation5 + $0x18] sm:$0xf]
    %v96 = vld [vmem:[#allocation5 + $0x1c] sm:$0xf]
    %v97 = vld [vmem:[#allocation5 + $0x20] sm:$0xf]
    %v98 = vld [vmem:[#allocation5 + $0x24] sm:$0xf]
    %v99 = vld [vmem:[#allocation5 + $0x28] sm:$0xf]
    %v100 = vld [vmem:[#allocation5 + $0x2c] sm:$0xf]
    %v101 = vld [vmem:[#allocation5 + $0x30] sm:$0xf]
    %v102 = vld [vmem:[#allocation5 + $0x34] sm:$0xf]
    %v103 = vld [vmem:[#allocation5 + $0x38] sm:$0xf]
    %v104 = vld [vmem:[#allocation5 + $0x3c] sm:$0xf]
    %v105 = vld [vmem:[#allocation5 + $0x40] sm:$0xf]
    %v106 = vld [vmem:[#allocation5 + $0x44] sm:$0xf]
    %v107 = vld [vmem:[#allocation5 + $0x48] sm:$0xf]
    %v108 = vld [vmem:[#allocation5 + $0x4c] sm:$0xf]
    %v109 = vld [vmem:[#allocation5 + $0x50] sm:$0xf]
    %v110 = vld [vmem:[#allocation5 + $0x54] sm:$0xf]
    %v111 = vld [vmem:[#allocation5 + $0x58] sm:$0xf]
    %v112 = vld [vmem:[#allocation5 + $0x5c] sm:$0xf]
    %v113 = vld [vmem:[#allocation5 + $0x60] sm:$0xf]
    %v114 = vld [vmem:[#allocation5 + $0x64] sm:$0xf]
    %v115 = vld [vmem:[#allocation5 + $0x68] sm:$0xf]
    %v116 = vld [vmem:[#allocation5 + $0x6c] sm:$0xf]
    %v117 = vld [vmem:[#allocation5 + $0x70] sm:$0xf]
    %v118 = vld [vmem:[#allocation5 + $0x74] sm:$0xf]
    %v119 = vld [vmem:[#allocation5 + $0x78] sm:$0xf]
    %v120 = vld [vmem:[#allocation5 + $0x7c] sm:$0xf]
    %v121 = vld [vmem:[#allocation5 + $0x80] sm:$0xf]
    %v122 = vld [vmem:[#allocation5 + $0x84] sm:$0xf]
    %v123 = vld [vmem:[#allocation5 + $0x88] sm:$0xf]
    %v124 = vld [vmem:[#allocation5 + $0x8c] sm:$0xf]
    %v125 = vld [vmem:[#allocation5 + $0x90] sm:$0xf]
    %v126 = vld [vmem:[#allocation5 + $0x94] sm:$0xf]
    %v127 = vld [vmem:[#allocation5 + $0x98] sm:$0xf]
    %v128 = vld [vmem:[#allocation5 + $0x9c] sm:$0xf]
    %v129 = vld [vmem:[#allocation5 + $0xa0] sm:$0xf]
    %v130 = vld [vmem:[#allocation5 + $0xa4] sm:$0xf]
    %v131 = vld [vmem:[#allocation5 + $0xa8] sm:$0xf]
    %v132 = vld [vmem:[#allocation5 + $0xac] sm:$0xf]
    %v133 = vld [vmem:[#allocation5 + $0xb0] sm:$0xf]
    %v134 = vld [vmem:[#allocation5 + $0xb4] sm:$0xf]
    %v135 = vld [vmem:[#allocation5 + $0xb8] sm:$0xf]
    %v136 = vld [vmem:[#allocation5 + $0xbc] sm:$0xf]
    %v137 = vld [vmem:[#allocation5 + $0xc0] sm:$0xf]
    %v138 = vld [vmem:[#allocation5 + $0xc4] sm:$0xf]
    %v139 = vld [vmem:[#allocation5 + $0xc8] sm:$0xf]
    %v140 = vld [vmem:[#allocation5 + $0xcc] sm:$0xf]
    %v141 = vld [vmem:[#allocation5 + $0xd0] sm:$0xf]
    %v142 = vld [vmem:[#allocation5 + $0xd4] sm:$0xf]
    %v143 = vld [vmem:[#allocation5 + $0xd8] sm:$0xf]
    %v144 = vld [vmem:[#allocation5 + $0xdc] sm:$0xf]
    %v145 = vld [vmem:[#allocation5 + $0xe0] sm:$0xf]
    %v146 = vld [vmem:[#allocation5 + $0xe4] sm:$0xf]
    %v147 = vld [vmem:[#allocation5 + $0xe8] sm:$0xf]
    %v148 = vld [vmem:[#allocation5 + $0xec] sm:$0xf]
    %v149 = vld [vmem:[#allocation5 + $0xf0] sm:$0xf]
    %v150 = vld [vmem:[#allocation5 + $0xf4] sm:$0xf]
    %v151 = vld [vmem:[#allocation5 + $0xf8] sm:$0xf]
    %v152 = vld [vmem:[#allocation5 + $0xfc] sm:$0xf]
    %v153 = vld [vmem:[#allocation5 + $0x100] sm:$0xf]
    %v154 = vld [vmem:[#allocation5 + $0x104] sm:$0xf]
    %v155 = vld [vmem:[#allocation5 + $0x108] sm:$0xf]
    %v156 = vld [vmem:[#allocation5 + $0x10c] sm:$0xf]
    %v157 = vld [vmem:[#allocation5 + $0x110] sm:$0xf]
    %v158 = vld [vmem:[#allocation5 + $0x114] sm:$0xf]
    %v159 = vld [vmem:[#allocation5 + $0x118] sm:$0xf]
    %v160 = vld [vmem:[#allocation5 + $0x11c] sm:$0xf]
    %v161 = vld [vmem:[#allocation5 + $0x120] sm:$0xf]
    %v162 = vld [vmem:[#allocation5 + $0x124] sm:$0xf]
    %v163 = vld [vmem:[#allocation5 + $0x128] sm:$0xf]
    %v164 = vld [vmem:[#allocation5 + $0x12c] sm:$0xf]
    %v165 = vld [vmem:[#allocation5 + $0x130] sm:$0xf]
    %v166 = vld [vmem:[#allocation5 + $0x134] sm:$0xf]
    %v167 = vld [vmem:[#allocation5 + $0x138] sm:$0xf]
    %v168 = vld [vmem:[#allocation5 + $0x13c] sm:$0xf]
    %v169 = vld [vmem:[#allocation5 + $0x140] sm:$0xf]
    %v170 = vld [vmem:[#allocation5 + $0x144] sm:$0xf]
    %v171 = vld [vmem:[#allocation5 + $0x148] sm:$0xf]
    %v172 = vld [vmem:[#allocation5 + $0x14c] sm:$0xf]
    %v173 = vld [vmem:[#allocation5 + $0x150] sm:$0xf]
    %v174 = vld [vmem:[#allocation5 + $0x154] sm:$0xf]
    %v175 = vld [vmem:[#allocation5 + $0x158] sm:$0xf]
    %v176 = vld [vmem:[#allocation5 + $0x15c] sm:$0xf]
    %v177 = vld [vmem:[#allocation5 + $0x160] sm:$0xf]
    %v178 = vld [vmem:[#allocation5 + $0x164] sm:$0xf]
    %v179 = vld [vmem:[#allocation5 + $0x168] sm:$0xf]
    %v180 = vld [vmem:[#allocation5 + $0x16c] sm:$0xf]
    %v181 = vld [vmem:[#allocation5 + $0x170] sm:$0xf]
    %v182 = vld [vmem:[#allocation5 + $0x174] sm:$0xf]
    %v183 = vld [vmem:[#allocation5 + $0x178] sm:$0xf]
    %v184 = vld [vmem:[#allocation5 + $0x17c] sm:$0xf]
    %v185 = vld [vmem:[#allocation5 + $0x180] sm:$0xf]
    %v186 = vld [vmem:[#allocation5 + $0x184] sm:$0xf]
    %v187 = vlaneseq
    %v188 = vshrl.u32 %v187, 7
    %v189 = vsub.s32 0, %v188
    %v190 = vrot.slane %v80, %v189
    %v199 = vunpack.c.l.b16 %v81
    %v200 = vunpack.c.h.b16 %v81
    %v201 = vunpack.c.l.b16 %v82
    %v202 = vunpack.c.h.b16 %v82
    %v203 = vunpack.c.l.b16 %v83
    %v204 = vunpack.c.h.b16 %v83
    %v205 = vunpack.c.l.b16 %v84
    %v206 = vunpack.c.l.b16 %v85
    %v207 = vunpack.c.h.b16 %v85
    %v208 = vunpack.c.l.b16 %v86
    %v209 = vunpack.c.h.b16 %v86
    %v210 = vunpack.c.l.b16 %v87
    %v211 = vunpack.c.h.b16 %v87
    %v212 = vunpack.c.l.b16 %v88
    %v213 = vpack.c.b16 %v206, %v199
    %v214 = vpack.c.b16 %v207, %v200
    %v215 = vpack.c.b16 %v208, %v201
    %v216 = vpack.c.b16 %v209, %v202
    %v217 = vpack.c.b16 %v210, %v203
    %v218 = vpack.c.b16 %v211, %v204
    %v219 = vpack.c.b16 %v212, %v205
    %v324 = vunpack.c.l.b16 %v89
    %v325 = vunpack.c.l.b16 %v90
    %v326 = vunpack.c.l.b16 %v91
    %v327 = vunpack.c.l.b16 %v92
    %v328 = vunpack.c.l.b16 %v93
    %v329 = vunpack.c.l.b16 %v94
    %v330 = vunpack.c.l.b16 %v95
    %v331 = vunpack.c.l.b16 %v96
    %v332 = vunpack.c.l.b16 %v97
    %v333 = vunpack.c.l.b16 %v98
    %v334 = vunpack.c.l.b16 %v99
    %v335 = vunpack.c.l.b16 %v100
    %v336 = vunpack.c.l.b16 %v101
    %v337 = vunpack.c.l.b16 %v102
    %v338 = vunpack.c.l.b16 %v103
    %v339 = vunpack.c.l.b16 %v104
    %v340 = vunpack.c.l.b16 %v105
    %v341 = vunpack.c.l.b16 %v106
    %v342 = vunpack.c.l.b16 %v107
    %v343 = vunpack.c.l.b16 %v108
    %v344 = vunpack.c.l.b16 %v109
    %v345 = vunpack.c.l.b16 %v110
    %v346 = vunpack.c.l.b16 %v111
    %v347 = vunpack.c.l.b16 %v112
    %v348 = vunpack.c.l.b16 %v113
    %v349 = vunpack.c.l.b16 %v114
    %v350 = vunpack.c.l.b16 %v115
    %v351 = vunpack.c.l.b16 %v116
    %v352 = vunpack.c.l.b16 %v117
    %v353 = vunpack.c.l.b16 %v118
    %v354 = vunpack.c.l.b16 %v119
    %v355 = vunpack.c.l.b16 %v120
    %v356 = vunpack.c.l.b16 %v121
    %v357 = vunpack.c.l.b16 %v122
    %v358 = vunpack.c.l.b16 %v123
    %v359 = vunpack.c.l.b16 %v124
    %v360 = vunpack.c.l.b16 %v125
    %v361 = vunpack.c.l.b16 %v126
    %v362 = vunpack.c.l.b16 %v127
    %v363 = vunpack.c.l.b16 %v128
    %v364 = vunpack.c.l.b16 %v129
    %v365 = vunpack.c.l.b16 %v130
    %v366 = vunpack.c.l.b16 %v131
    %v367 = vunpack.c.l.b16 %v132
    %v368 = vunpack.c.l.b16 %v133
    %v369 = vunpack.c.l.b16 %v134
    %v370 = vunpack.c.l.b16 %v135
    %v371 = vunpack.c.l.b16 %v136
    %v372 = vunpack.c.l.b16 %v137
    %v373 = vunpack.c.l.b16 %v138
    %v374 = vunpack.c.l.b16 %v139
    %v375 = vunpack.c.l.b16 %v140
    %v376 = vunpack.c.l.b16 %v141
    %v377 = vunpack.c.l.b16 %v142
    %v378 = vunpack.c.l.b16 %v143
    %v379 = vunpack.c.l.b16 %v144
    %v380 = vunpack.c.l.b16 %v145
    %v381 = vunpack.c.l.b16 %v146
    %v382 = vunpack.c.l.b16 %v147
    %v383 = vunpack.c.l.b16 %v148
    %v384 = vunpack.c.l.b16 %v149
    %v385 = vunpack.c.l.b16 %v150
    %v386 = vunpack.c.l.b16 %v151
    %v387 = vunpack.c.l.b16 %v152
    %v388 = vunpack.c.l.b16 %v153
    %v389 = vunpack.c.l.b16 %v154
    %v390 = vunpack.c.l.b16 %v155
    %v391 = vunpack.c.l.b16 %v156
    %v392 = vunpack.c.l.b16 %v157
    %v393 = vunpack.c.l.b16 %v158
    %v394 = vunpack.c.l.b16 %v159
    %v395 = vunpack.c.l.b16 %v160
    %v396 = vunpack.c.l.b16 %v161
    %v397 = vunpack.c.l.b16 %v162
    %v398 = vunpack.c.l.b16 %v163
    %v399 = vunpack.c.l.b16 %v164
    %v400 = vunpack.c.l.b16 %v165
    %v401 = vunpack.c.l.b16 %v166
    %v402 = vunpack.c.l.b16 %v167
    %v403 = vunpack.c.l.b16 %v168
    %v404 = vunpack.c.l.b16 %v169
    %v405 = vunpack.c.l.b16 %v170
    %v406 = vunpack.c.l.b16 %v171
    %v407 = vunpack.c.l.b16 %v172
    %v408 = vunpack.c.l.b16 %v173
    %v409 = vunpack.c.l.b16 %v174
    %v410 = vunpack.c.l.b16 %v175
    %v411 = vunpack.c.l.b16 %v176
    %v412 = vunpack.c.l.b16 %v177
    %v413 = vunpack.c.l.b16 %v178
    %v414 = vunpack.c.l.b16 %v179
    %v415 = vunpack.c.l.b16 %v180
    %v416 = vunpack.c.l.b16 %v181
    %v417 = vunpack.c.l.b16 %v182
    %v418 = vunpack.c.l.b16 %v183
    %v419 = vunpack.c.l.b16 %v184
    %v420 = vunpack.c.l.b16 %v185
    %v421 = vunpack.c.l.b16 %v186
    %v422 = vpack.c.b16 %v325, %v324
    %v423 = vpack.c.b16 %v327, %v326
    %v424 = vpack.c.b16 %v329, %v328
    %v425 = vpack.c.b16 %v331, %v330
    %v426 = vpack.c.b16 %v333, %v332
    %v427 = vpack.c.b16 %v335, %v334
    %v428 = vpack.c.b16 %v337, %v336
    %v429 = vpack.c.b16 %v339, %v338
    %v430 = vpack.c.b16 %v341, %v340
    %v431 = vpack.c.b16 %v343, %v342
    %v432 = vpack.c.b16 %v345, %v344
    %v433 = vpack.c.b16 %v347, %v346
    %v434 = vpack.c.b16 %v349, %v348
    %v435 = vpack.c.b16 %v351, %v350
    %v436 = vpack.c.b16 %v353, %v352
    %v437 = vpack.c.b16 %v355, %v354
    %v438 = vpack.c.b16 %v357, %v356
    %v439 = vpack.c.b16 %v359, %v358
    %v440 = vpack.c.b16 %v361, %v360
    %v441 = vpack.c.b16 %v363, %v362
    %v442 = vpack.c.b16 %v365, %v364
    %v443 = vpack.c.b16 %v367, %v366
    %v444 = vpack.c.b16 %v369, %v368
    %v445 = vpack.c.b16 %v371, %v370
    %v446 = vpack.c.b16 %v373, %v372
    %v447 = vpack.c.b16 %v375, %v374
    %v448 = vpack.c.b16 %v377, %v376
    %v449 = vpack.c.b16 %v379, %v378
    %v450 = vpack.c.b16 %v381, %v380
    %v451 = vpack.c.b16 %v383, %v382
    %v452 = vpack.c.b16 %v385, %v384
    %v453 = vpack.c.b16 %v387, %v386
    %v454 = vpack.c.b16 %v389, %v388
    %v455 = vpack.c.b16 %v391, %v390
    %v456 = vpack.c.b16 %v393, %v392
    %v457 = vpack.c.b16 %v395, %v394
    %v458 = vpack.c.b16 %v397, %v396
    %v459 = vpack.c.b16 %v399, %v398
    %v460 = vpack.c.b16 %v401, %v400
    %v461 = vpack.c.b16 %v403, %v402
    %v462 = vpack.c.b16 %v405, %v404
    %v463 = vpack.c.b16 %v407, %v406
    %v464 = vpack.c.b16 %v409, %v408
    %v465 = vpack.c.b16 %v411, %v410
    %v466 = vpack.c.b16 %v413, %v412
    %v467 = vpack.c.b16 %v415, %v414
    %v468 = vpack.c.b16 %v417, %v416
    %v469 = vpack.c.b16 %v419, %v418
    %v470 = vpack.c.b16 %v421, %v420
    %vm520 = vcmask 130048
    %v522 = vsel %vm520, %v219, 0
    %524 = vmatprep.subr.bf16.mxu0 0
    %525 = vmatpush1.bf16.msra.mxu0 %v422
    %526 = vmatprep.subr.bf16.mxu0 0
    %527 = vmatpush1.bf16.msra.mxu0 %v423
    %528 = vmatprep.subr.bf16.mxu0 0
    %529 = vmatpush1.bf16.msra.mxu0 %v424
    %530 = vmatprep.subr.bf16.mxu0 0
    %531 = vmatpush1.bf16.msra.mxu0 %v425
    %532 = vmatprep.subr.bf16.mxu0 0
    %533 = vmatpush1.bf16.msra.mxu0 %v426
    %534 = vmatprep.subr.bf16.mxu0 0
    %535 = vmatpush1.bf16.msra.mxu0 %v427
    %536 = vmatprep.subr.bf16.mxu0 0
    %537 = vmatpush1.bf16.msra.mxu0 %v428
    %538 = vmatprep.subr.bf16.mxu0 0
    %539 = vmatpush1.bf16.msra.mxu0 %v429
    %540 = vmatprep.subr.bf16.mxu0 0
    %541 = vmatpush1.bf16.msra.mxu0 %v430
    %542 = vmatprep.subr.bf16.mxu0 0
    %543 = vmatpush1.bf16.msra.mxu0 %v431
    %544 = vmatprep.subr.bf16.mxu0 0
    %545 = vmatpush1.bf16.msra.mxu0 %v432
    %546 = vmatprep.subr.bf16.mxu0 0
    %547 = vmatpush1.bf16.msra.mxu0 %v433
    %548 = vmatprep.subr.bf16.mxu0 0
    %549 = vmatpush1.bf16.msra.mxu0 %v434
    %550 = vmatprep.subr.bf16.mxu0 0
    %551 = vmatpush1.bf16.msra.mxu0 %v435
    %552 = vmatprep.subr.bf16.mxu0 0
    %553 = vmatpush1.bf16.msra.mxu0 %v436
    %554 = vmatprep.subr.bf16.mxu0 0
    %555 = vmatpush1.bf16.msra.mxu0 %v437
    %556 = vmatprep.mubr.bf16.mxu0 %v214
    %557 = vmatmul.mubr.bf16.gmra.mrb[0].mxu0 %v213
    %v558 = vpop.f32.mrb[0].mxu0
    %v559 = vadd.f32 %v190, %v558
    %v560 = vpop.f32.mrb[0].mxu0
    %v561 = vpop.f32.mrb[0].mxu0
    %v562 = vadd.f32 %v190, %v561
    %v563 = vpop.f32.mrb[0].mxu0
    %564 = vdwg.mxu0
    %565 = vmatprep.subr.bf16.mxu0 0
    %566 = vmatpush1.bf16.msra.mxu0 %v438
    %567 = vmatprep.subr.bf16.mxu0 0
    %568 = vmatpush1.bf16.msra.mxu0 %v439
    %569 = vmatprep.subr.bf16.mxu0 0
    %570 = vmatpush1.bf16.msra.mxu0 %v440
    %571 = vmatprep.subr.bf16.mxu0 0
    %572 = vmatpush1.bf16.msra.mxu0 %v441
    %573 = vmatprep.subr.bf16.mxu0 0
    %574 = vmatpush1.bf16.msra.mxu0 %v442
    %575 = vmatprep.subr.bf16.mxu0 0
    %576 = vmatpush1.bf16.msra.mxu0 %v443
    %577 = vmatprep.subr.bf16.mxu0 0
    %578 = vmatpush1.bf16.msra.mxu0 %v444
    %579 = vmatprep.subr.bf16.mxu0 0
    %580 = vmatpush1.bf16.msra.mxu0 %v445
    %581 = vmatprep.subr.bf16.mxu0 0
    %582 = vmatpush1.bf16.msra.mxu0 %v446
    %583 = vmatprep.subr.bf16.mxu0 0
    %584 = vmatpush1.bf16.msra.mxu0 %v447
    %585 = vmatprep.subr.bf16.mxu0 0
    %586 = vmatpush1.bf16.msra.mxu0 %v448
    %587 = vmatprep.subr.bf16.mxu0 0
    %588 = vmatpush1.bf16.msra.mxu0 %v449
    %589 = vmatprep.subr.bf16.mxu0 0
    %590 = vmatpush1.bf16.msra.mxu0 %v450
    %591 = vmatprep.subr.bf16.mxu0 0
    %592 = vmatpush1.bf16.msra.mxu0 %v451
    %593 = vmatprep.subr.bf16.mxu0 0
    %594 = vmatpush1.bf16.msra.mxu0 %v452
    %595 = vmatprep.subr.bf16.mxu0 0
    %596 = vmatpush1.bf16.msra.mxu0 %v453
    %597 = vmatprep.mubr.bf16.mxu0 %v216
    %598 = vmatmul.mubr.bf16.gmra.mrb[0].mxu0 %v215
    %v599 = vpop.f32.mrb[0].mxu0
    %v600 = vadd.f32 %v559, %v599
    %v601 = vpop.f32.mrb[0].mxu0
    %v602 = vpop.f32.mrb[0].mxu0
    %v603 = vadd.f32 %v562, %v602
    %v604 = vpop.f32.mrb[0].mxu0
    %605 = vdwg.mxu0
    %606 = vmatprep.subr.bf16.mxu0 0
    %607 = vmatpush1.bf16.msra.mxu0 %v454
    %608 = vmatprep.subr.bf16.mxu0 0
    %609 = vmatpush1.bf16.msra.mxu0 %v455
    %610 = vmatprep.subr.bf16.mxu0 0
    %611 = vmatpush1.bf16.msra.mxu0 %v456
    %612 = vmatprep.subr.bf16.mxu0 0
    %613 = vmatpush1.bf16.msra.mxu0 %v457
    %614 = vmatprep.subr.bf16.mxu0 0
    %615 = vmatpush1.bf16.msra.mxu0 %v458
    %616 = vmatprep.subr.bf16.mxu0 0
    %617 = vmatpush1.bf16.msra.mxu0 %v459
    %618 = vmatprep.subr.bf16.mxu0 0
    %619 = vmatpush1.bf16.msra.mxu0 %v460
    %620 = vmatprep.subr.bf16.mxu0 0
    %621 = vmatpush1.bf16.msra.mxu0 %v461
    %622 = vmatprep.subr.bf16.mxu0 0
    %623 = vmatpush1.bf16.msra.mxu0 %v462
    %624 = vmatprep.subr.bf16.mxu0 0
    %625 = vmatpush1.bf16.msra.mxu0 %v463
    %626 = vmatprep.subr.bf16.mxu0 0
    %627 = vmatpush1.bf16.msra.mxu0 %v464
    %628 = vmatprep.subr.bf16.mxu0 0
    %629 = vmatpush1.bf16.msra.mxu0 %v465
    %630 = vmatprep.subr.bf16.mxu0 0
    %631 = vmatpush1.bf16.msra.mxu0 %v466
    %632 = vmatprep.subr.bf16.mxu0 0
    %633 = vmatpush1.bf16.msra.mxu0 %v467
    %634 = vmatprep.subr.bf16.mxu0 0
    %635 = vmatpush1.bf16.msra.mxu0 %v468
    %636 = vmatprep.subr.bf16.mxu0 0
    %637 = vmatpush1.bf16.msra.mxu0 %v469
    %638 = vmatprep.mubr.bf16.mxu0 %v218
    %639 = vmatmul.mubr.bf16.gmra.mrb[0].mxu0 %v217
    %v640 = vpop.f32.mrb[0].mxu0
    %v641 = vadd.f32 %v600, %v640
    %v642 = vpop.f32.mrb[0].mxu0
    %v643 = vpop.f32.mrb[0].mxu0
    %v644 = vadd.f32 %v603, %v643
    %v645 = vpop.f32.mrb[0].mxu0
    %646 = vdwg.mxu0
    %647 = vmatprep.subr.bf16.mxu0 0
    %648 = vmatpush1.bf16.msra.mxu0 %v470
    %649 = vmatprep.subr.bf16.mxu0 0
    %650 = vmatpush1.bf16.msra.mxu0 0
    %651 = vmatprep.subr.bf16.mxu0 0
    %652 = vmatpush1.bf16.msra.mxu0 0
    %653 = vmatprep.subr.bf16.mxu0 0
    %654 = vmatpush1.bf16.msra.mxu0 0
    %655 = vmatprep.subr.bf16.mxu0 0
    %656 = vmatpush1.bf16.msra.mxu0 0
    %657 = vmatprep.subr.bf16.mxu0 0
    %658 = vmatpush1.bf16.msra.mxu0 0
    %659 = vmatprep.subr.bf16.mxu0 0
    %660 = vmatpush1.bf16.msra.mxu0 0
    %661 = vmatprep.subr.bf16.mxu0 0
    %662 = vmatpush1.bf16.msra.mxu0 0
    %663 = vmatprep.subr.bf16.mxu0 0
    %664 = vmatpush1.bf16.msra.mxu0 0
    %665 = vmatprep.subr.bf16.mxu0 0
    %666 = vmatpush1.bf16.msra.mxu0 0
    %667 = vmatprep.subr.bf16.mxu0 0
    %668 = vmatpush1.bf16.msra.mxu0 0
    %669 = vmatprep.subr.bf16.mxu0 0
    %670 = vmatpush1.bf16.msra.mxu0 0
    %671 = vmatprep.subr.bf16.mxu0 0
    %672 = vmatpush1.bf16.msra.mxu0 0
    %673 = vmatprep.subr.bf16.mxu0 0
    %674 = vmatpush1.bf16.msra.mxu0 0
    %675 = vmatprep.subr.bf16.mxu0 0
    %676 = vmatpush1.bf16.msra.mxu0 0
    %677 = vmatprep.subr.bf16.mxu0 0
    %678 = vmatpush1.bf16.msra.mxu0 0
    %679 = vmatprep.mubr.bf16.mxu0 0
    %680 = vmatmul.mubr.bf16.gmra.mrb[0].mxu0 %v522
    %v681 = vpop.f32.mrb[0].mxu0
    %v682 = vadd.f32 %v641, %v681
    %v683 = vpop.f32.mrb[0].mxu0
    %v684 = vpop.f32.mrb[0].mxu0
    %v685 = vadd.f32 %v644, %v684
    %v686 = vpop.f32.mrb[0].mxu0
    %687 = vdwg.mxu0
    %v688 = vmax.f32 %v682, 0.0
    %v689 = vmax.f32 %v685, 0.0
    %v690 = vpack.c.bf16 %v689, %v688
    %v691 = vld [vmem:[#allocation7] sm:$0xf]
    %v692 = vld [vmem:[#allocation7 + $0x4] sm:$0xf]
    %v693 = vld [vmem:[#allocation7 + $0x8] sm:$0xf]
    %v694 = vld [vmem:[#allocation7 + $0xc] sm:$0xf]
    %v695 = vld [vmem:[#allocation7 + $0x10] sm:$0xf]
    %v696 = vld [vmem:[#allocation7 + $0x14] sm:$0xf]
    %v697 = vld [vmem:[#allocation7 + $0x18] sm:$0xf]
    %v698 = vld [vmem:[#allocation7 + $0x1c] sm:$0xf]
    %v699 = vld [vmem:[#allocation7 + $0x20] sm:$0xf]
    %v700 = vld [vmem:[#allocation7 + $0x24] sm:$0xf]
    %v701 = vld [vmem:[#allocation7 + $0x28] sm:$0xf]
    %v702 = vld [vmem:[#allocation7 + $0x2c] sm:$0xf]
    %v703 = vld [vmem:[#allocation7 + $0x30] sm:$0xf]
    %v704 = vld [vmem:[#allocation7 + $0x34] sm:$0xf]
    %v705 = vld [vmem:[#allocation7 + $0x38] sm:$0xf]
    %v706 = vld [vmem:[#allocation7 + $0x3c] sm:$0xf]
    %v707 = vld [vmem:[%s3 + $0x1] sm:$0x1]
    %v708 = vlaneseq
    %v709 = vshrl.u32 %v708, 7
    %v710 = vsub.s32 0, %v709
    %v711 = vrot.slane %v707, %v710
    %v728 = vunpack.c.l.b16 %v691
    %v729 = vunpack.c.l.b16 %v692
    %v730 = vunpack.c.l.b16 %v693
    %v731 = vunpack.c.l.b16 %v694
    %v732 = vunpack.c.l.b16 %v695
    %v733 = vunpack.c.l.b16 %v696
    %v734 = vunpack.c.l.b16 %v697
    %v735 = vunpack.c.l.b16 %v698
    %v736 = vunpack.c.l.b16 %v699
    %v737 = vunpack.c.l.b16 %v700
    %v738 = vunpack.c.l.b16 %v701
    %v739 = vunpack.c.l.b16 %v702
    %v740 = vunpack.c.l.b16 %v703
    %v741 = vunpack.c.l.b16 %v704
    %v742 = vunpack.c.l.b16 %v705
    %v743 = vunpack.c.l.b16 %v706
    %v744 = vpack.c.b16 %v729, %v728
    %v745 = vpack.c.b16 %v731, %v730
    %v746 = vpack.c.b16 %v733, %v732
    %v747 = vpack.c.b16 %v735, %v734
    %v748 = vpack.c.b16 %v737, %v736
    %v749 = vpack.c.b16 %v739, %v738
    %v750 = vpack.c.b16 %v741, %v740
    %v751 = vpack.c.b16 %v743, %v742
    %760 = vmatprep.subr.bf16.mxu0 0
    %761 = vmatpush1.bf16.msra.mxu0 %v744
    %762 = vmatprep.subr.bf16.mxu0 0
    %763 = vmatpush1.bf16.msra.mxu0 %v745
    %764 = vmatprep.subr.bf16.mxu0 0
    %765 = vmatpush1.bf16.msra.mxu0 %v746
    %766 = vmatprep.subr.bf16.mxu0 0
    %767 = vmatpush1.bf16.msra.mxu0 %v747
    %768 = vmatprep.subr.bf16.mxu0 0
    %769 = vmatpush1.bf16.msra.mxu0 %v748
    %770 = vmatprep.subr.bf16.mxu0 0
    %771 = vmatpush1.bf16.msra.mxu0 %v749
    %772 = vmatprep.subr.bf16.mxu0 0
    %773 = vmatpush1.bf16.msra.mxu0 %v750
    %774 = vmatprep.subr.bf16.mxu0 0
    %775 = vmatpush1.bf16.msra.mxu0 %v751
    %776 = vmatprep.subr.bf16.mxu0 0
    %777 = vmatpush1.bf16.msra.mxu0 0
    %778 = vmatprep.subr.bf16.mxu0 0
    %779 = vmatpush1.bf16.msra.mxu0 0
    %780 = vmatprep.subr.bf16.mxu0 0
    %781 = vmatpush1.bf16.msra.mxu0 0
    %782 = vmatprep.subr.bf16.mxu0 0
    %783 = vmatpush1.bf16.msra.mxu0 0
    %784 = vmatprep.subr.bf16.mxu0 0
    %785 = vmatpush1.bf16.msra.mxu0 0
    %786 = vmatprep.subr.bf16.mxu0 0
    %787 = vmatpush1.bf16.msra.mxu0 0
    %788 = vmatprep.subr.bf16.mxu0 0
    %789 = vmatpush1.bf16.msra.mxu0 0
    %790 = vmatprep.subr.bf16.mxu0 0
    %791 = vmatpush1.bf16.msra.mxu0 0
    %792 = vmatprep.mubr.bf16.mxu0 0
    %793 = vmatmul.mubr.bf16.gmra.mrb[0].mxu0 %v690
    %v794 = vpop.f32.mrb[0].mxu0
    %v795 = vadd.f32 %v711, %v794
    %v796 = vpop.f32.mrb[0].mxu0
    %v797 = vpop.f32.mrb[0].mxu0
    %v798 = vadd.f32 %v711, %v797
    %v799 = vpop.f32.mrb[0].mxu0
    %800 = vdwg.mxu0
    %v801 = vmax.f32 %v795, 0.0
    %v802 = vmax.f32 %v798, 0.0
    %v803 = vpack.c.bf16 %v802, %v801
    %s804 = scalar_lea.vmem [#allocation7], 64
    %v805 = vld [vmem:[%s804] sm:$0xf]
    %v806 = vld [vmem:[%s804 + $0x4] sm:$0xf]
    %v807 = vld [vmem:[%s804 + $0x8] sm:$0xf]
    %v808 = vld [vmem:[%s804 + $0xc] sm:$0xf]
    %v809 = vld [vmem:[%s804 + $0x10] sm:$0xf]
    %v810 = vld [vmem:[%s804 + $0x14] sm:$0xf]
    %v811 = vld [vmem:[%s804 + $0x18] sm:$0xf]
    %v812 = vld [vmem:[%s804 + $0x1c] sm:$0xf]
    %v813 = vld [vmem:[%s804 + $0x20] sm:$0xf]
    %v814 = vld [vmem:[%s804 + $0x24] sm:$0xf]
    %v815 = vld [vmem:[%s804 + $0x28] sm:$0xf]
    %v816 = vld [vmem:[%s804 + $0x2c] sm:$0xf]
    %v817 = vld [vmem:[%s804 + $0x30] sm:$0xf]
    %v818 = vld [vmem:[%s804 + $0x34] sm:$0xf]
    %v819 = vld [vmem:[%s804 + $0x38] sm:$0xf]
    %v820 = vld [vmem:[%s804 + $0x3c] sm:$0xf]
    %v821 = vld [vmem:[%s3 + $0x2] sm:$0x1]
    %v822 = vlaneseq
    %v823 = vshrl.u32 %v822, 7
    %v824 = vsub.s32 0, %v823
    %v825 = vrot.slane %v821, %v824
    %v842 = vunpack.c.l.b16 %v805
    %v843 = vunpack.c.l.b16 %v806
    %v844 = vunpack.c.l.b16 %v807
    %v845 = vunpack.c.l.b16 %v808
    %v846 = vunpack.c.l.b16 %v809
    %v847 = vunpack.c.l.b16 %v810
    %v848 = vunpack.c.l.b16 %v811
    %v849 = vunpack.c.l.b16 %v812
    %v850 = vunpack.c.l.b16 %v813
    %v851 = vunpack.c.l.b16 %v814
    %v852 = vunpack.c.l.b16 %v815
    %v853 = vunpack.c.l.b16 %v816
    %v854 = vunpack.c.l.b16 %v817
    %v855 = vunpack.c.l.b16 %v818
    %v856 = vunpack.c.l.b16 %v819
    %v857 = vunpack.c.l.b16 %v820
    %v858 = vpack.c.b16 %v843, %v842
    %v859 = vpack.c.b16 %v845, %v844
    %v860 = vpack.c.b16 %v847, %v846
    %v861 = vpack.c.b16 %v849, %v848
    %v862 = vpack.c.b16 %v851, %v850
    %v863 = vpack.c.b16 %v853, %v852
    %v864 = vpack.c.b16 %v855, %v854
    %v865 = vpack.c.b16 %v857, %v856
    %874 = vmatprep.subr.bf16.mxu0 0
    %875 = vmatpush1.bf16.msra.mxu0 %v858
    %876 = vmatprep.subr.bf16.mxu0 0
    %877 = vmatpush1.bf16.msra.mxu0 %v859
    %878 = vmatprep.subr.bf16.mxu0 0
    %879 = vmatpush1.bf16.msra.mxu0 %v860
    %880 = vmatprep.subr.bf16.mxu0 0
    %881 = vmatpush1.bf16.msra.mxu0 %v861
    %882 = vmatprep.subr.bf16.mxu0 0
    %883 = vmatpush1.bf16.msra.mxu0 %v862
    %884 = vmatprep.subr.bf16.mxu0 0
    %885 = vmatpush1.bf16.msra.mxu0 %v863
    %886 = vmatprep.subr.bf16.mxu0 0
    %887 = vmatpush1.bf16.msra.mxu0 %v864
    %888 = vmatprep.subr.bf16.mxu0 0
    %889 = vmatpush1.bf16.msra.mxu0 %v865
    %890 = vmatprep.subr.bf16.mxu0 0
    %891 = vmatpush1.bf16.msra.mxu0 0
    %892 = vmatprep.subr.bf16.mxu0 0
    %893 = vmatpush1.bf16.msra.mxu0 0
    %894 = vmatprep.subr.bf16.mxu0 0
    %895 = vmatpush1.bf16.msra.mxu0 0
    %896 = vmatprep.subr.bf16.mxu0 0
    %897 = vmatpush1.bf16.msra.mxu0 0
    %898 = vmatprep.subr.bf16.mxu0 0
    %899 = vmatpush1.bf16.msra.mxu0 0
    %900 = vmatprep.subr.bf16.mxu0 0
    %901 = vmatpush1.bf16.msra.mxu0 0
    %902 = vmatprep.subr.bf16.mxu0 0
    %903 = vmatpush1.bf16.msra.mxu0 0
    %904 = vmatprep.subr.bf16.mxu0 0
    %905 = vmatpush1.bf16.msra.mxu0 0
    %906 = vmatprep.mubr.bf16.mxu0 0
    %907 = vmatmul.mubr.bf16.gmra.mrb[0].mxu0 %v803
    %v908 = vpop.f32.mrb[0].mxu0
    %v909 = vadd.f32 %v825, %v908
    %v910 = vpop.f32.mrb[0].mxu0
    %v911 = vpop.f32.mrb[0].mxu0
    %v912 = vadd.f32 %v825, %v911
    %v913 = vpop.f32.mrb[0].mxu0
    %914 = vdwg.mxu0
    %v915 = vmax.f32 %v909, 0.0
    %v916 = vmax.f32 %v912, 0.0
    %v917 = vpack.c.bf16 %v916, %v915
    %s918 = scalar_lea.vmem [#allocation7], 128
    %v919 = vld [vmem:[%s918] sm:$0xf]
    %v920 = vld [vmem:[%s918 + $0x4] sm:$0xf]
    %v921 = vld [vmem:[%s918 + $0x8] sm:$0xf]
    %v922 = vld [vmem:[%s918 + $0xc] sm:$0xf]
    %v923 = vld [vmem:[%s918 + $0x10] sm:$0xf]
    %v924 = vld [vmem:[%s918 + $0x14] sm:$0xf]
    %v925 = vld [vmem:[%s918 + $0x18] sm:$0xf]
    %v926 = vld [vmem:[%s918 + $0x1c] sm:$0xf]
    %v927 = vld [vmem:[%s918 + $0x20] sm:$0xf]
    %v928 = vld [vmem:[%s918 + $0x24] sm:$0xf]
    %v929 = vld [vmem:[%s918 + $0x28] sm:$0xf]
    %v930 = vld [vmem:[%s918 + $0x2c] sm:$0xf]
    %v931 = vld [vmem:[%s918 + $0x30] sm:$0xf]
    %v932 = vld [vmem:[%s918 + $0x34] sm:$0xf]
    %v933 = vld [vmem:[%s918 + $0x38] sm:$0xf]
    %v934 = vld [vmem:[%s918 + $0x3c] sm:$0xf]
    %v935 = vld [vmem:[%s3 + $0x3] sm:$0x1]
    %v936 = vlaneseq
    %v937 = vshrl.u32 %v936, 7
    %v938 = vsub.s32 0, %v937
    %v939 = vrot.slane %v935, %v938
    %v956 = vunpack.c.l.b16 %v919
    %v957 = vunpack.c.l.b16 %v920
    %v958 = vunpack.c.l.b16 %v921
    %v959 = vunpack.c.l.b16 %v922
    %v960 = vunpack.c.l.b16 %v923
    %v961 = vunpack.c.l.b16 %v924
    %v962 = vunpack.c.l.b16 %v925
    %v963 = vunpack.c.l.b16 %v926
    %v964 = vunpack.c.l.b16 %v927
    %v965 = vunpack.c.l.b16 %v928
    %v966 = vunpack.c.l.b16 %v929
    %v967 = vunpack.c.l.b16 %v930
    %v968 = vunpack.c.l.b16 %v931
    %v969 = vunpack.c.l.b16 %v932
    %v970 = vunpack.c.l.b16 %v933
    %v971 = vunpack.c.l.b16 %v934
    %v972 = vpack.c.b16 %v957, %v956
    %v973 = vpack.c.b16 %v959, %v958
    %v974 = vpack.c.b16 %v961, %v960
    %v975 = vpack.c.b16 %v963, %v962
    %v976 = vpack.c.b16 %v965, %v964
    %v977 = vpack.c.b16 %v967, %v966
    %v978 = vpack.c.b16 %v969, %v968
    %v979 = vpack.c.b16 %v971, %v970
    %988 = vmatprep.subr.bf16.mxu0 0
    %989 = vmatpush1.bf16.msra.mxu0 %v972
    %990 = vmatprep.subr.bf16.mxu0 0
    %991 = vmatpush1.bf16.msra.mxu0 %v973
    %992 = vmatprep.subr.bf16.mxu0 0
    %993 = vmatpush1.bf16.msra.mxu0 %v974
    %994 = vmatprep.subr.bf16.mxu0 0
    %995 = vmatpush1.bf16.msra.mxu0 %v975
    %996 = vmatprep.subr.bf16.mxu0 0
    %997 = vmatpush1.bf16.msra.mxu0 %v976
    %998 = vmatprep.subr.bf16.mxu0 0
    %999 = vmatpush1.bf16.msra.mxu0 %v977
    %1000 = vmatprep.subr.bf16.mxu0 0
    %1001 = vmatpush1.bf16.msra.mxu0 %v978
    %1002 = vmatprep.subr.bf16.mxu0 0
    %1003 = vmatpush1.bf16.msra.mxu0 %v979
    %1004 = vmatprep.subr.bf16.mxu0 0
    %1005 = vmatpush1.bf16.msra.mxu0 0
    %1006 = vmatprep.subr.bf16.mxu0 0
    %1007 = vmatpush1.bf16.msra.mxu0 0
    %1008 = vmatprep.subr.bf16.mxu0 0
    %1009 = vmatpush1.bf16.msra.mxu0 0
    %1010 = vmatprep.subr.bf16.mxu0 0
    %1011 = vmatpush1.bf16.msra.mxu0 0
    %1012 = vmatprep.subr.bf16.mxu0 0
    %1013 = vmatpush1.bf16.msra.mxu0 0
    %1014 = vmatprep.subr.bf16.mxu0 0
    %1015 = vmatpush1.bf16.msra.mxu0 0
    %1016 = vmatprep.subr.bf16.mxu0 0
    %1017 = vmatpush1.bf16.msra.mxu0 0
    %1018 = vmatprep.subr.bf16.mxu0 0
    %1019 = vmatpush1.bf16.msra.mxu0 0
    %1020 = vmatprep.mubr.bf16.mxu0 0
    %1021 = vmatmul.mubr.bf16.gmra.mrb[0].mxu0 %v917
    %v1022 = vpop.f32.mrb[0].mxu0
    %v1023 = vadd.f32 %v939, %v1022
    %v1024 = vpop.f32.mrb[0].mxu0
    %v1025 = vpop.f32.mrb[0].mxu0
    %v1026 = vadd.f32 %v939, %v1025
    %v1027 = vpop.f32.mrb[0].mxu0
    %1028 = vdwg.mxu0
    %v1029 = vmax.f32 %v1023, 0.0
    %v1030 = vmax.f32 %v1026, 0.0
    %v1031 = vpack.c.bf16 %v1030, %v1029
    %s1032 = scalar_lea.vmem [#allocation7], 192
    %v1033 = vld [vmem:[%s1032] sm:$0xf]
    %v1034 = vld [vmem:[%s1032 + $0x4] sm:$0xf]
    %v1035 = vld [vmem:[%s1032 + $0x8] sm:$0xf]
    %v1036 = vld [vmem:[%s1032 + $0xc] sm:$0xf]
    %v1037 = vld [vmem:[%s1032 + $0x10] sm:$0xf]
    %v1038 = vld [vmem:[%s1032 + $0x14] sm:$0xf]
    %v1039 = vld [vmem:[%s1032 + $0x18] sm:$0xf]
    %v1040 = vld [vmem:[%s1032 + $0x1c] sm:$0xf]
    %v1041 = vld [vmem:[%s1032 + $0x20] sm:$0xf]
    %v1042 = vld [vmem:[%s1032 + $0x24] sm:$0xf]
    %v1043 = vld [vmem:[%s1032 + $0x28] sm:$0xf]
    %v1044 = vld [vmem:[%s1032 + $0x2c] sm:$0xf]
    %v1045 = vld [vmem:[%s1032 + $0x30] sm:$0xf]
    %v1046 = vld [vmem:[%s1032 + $0x34] sm:$0xf]
    %v1047 = vld [vmem:[%s1032 + $0x38] sm:$0xf]
    %v1048 = vld [vmem:[%s1032 + $0x3c] sm:$0xf]
    %v1049 = vld [vmem:[%s3 + $0x4] sm:$0x1]
    %v1050 = vlaneseq
    %v1051 = vshrl.u32 %v1050, 7
    %v1052 = vsub.s32 0, %v1051
    %v1053 = vrot.slane %v1049, %v1052
    %v1070 = vunpack.c.l.b16 %v1033
    %v1071 = vunpack.c.l.b16 %v1034
    %v1072 = vunpack.c.l.b16 %v1035
    %v1073 = vunpack.c.l.b16 %v1036
    %v1074 = vunpack.c.l.b16 %v1037
    %v1075 = vunpack.c.l.b16 %v1038
    %v1076 = vunpack.c.l.b16 %v1039
    %v1077 = vunpack.c.l.b16 %v1040
    %v1078 = vunpack.c.l.b16 %v1041
    %v1079 = vunpack.c.l.b16 %v1042
    %v1080 = vunpack.c.l.b16 %v1043
    %v1081 = vunpack.c.l.b16 %v1044
    %v1082 = vunpack.c.l.b16 %v1045
    %v1083 = vunpack.c.l.b16 %v1046
    %v1084 = vunpack.c.l.b16 %v1047
    %v1085 = vunpack.c.l.b16 %v1048
    %v1086 = vpack.c.b16 %v1071, %v1070
    %v1087 = vpack.c.b16 %v1073, %v1072
    %v1088 = vpack.c.b16 %v1075, %v1074
    %v1089 = vpack.c.b16 %v1077, %v1076
    %v1090 = vpack.c.b16 %v1079, %v1078
    %v1091 = vpack.c.b16 %v1081, %v1080
    %v1092 = vpack.c.b16 %v1083, %v1082
    %v1093 = vpack.c.b16 %v1085, %v1084
    %1102 = vmatprep.subr.bf16.mxu0 0
    %1103 = vmatpush1.bf16.msra.mxu0 %v1086
    %1104 = vmatprep.subr.bf16.mxu0 0
    %1105 = vmatpush1.bf16.msra.mxu0 %v1087
    %1106 = vmatprep.subr.bf16.mxu0 0
    %1107 = vmatpush1.bf16.msra.mxu0 %v1088
    %1108 = vmatprep.subr.bf16.mxu0 0
    %1109 = vmatpush1.bf16.msra.mxu0 %v1089
    %1110 = vmatprep.subr.bf16.mxu0 0
    %1111 = vmatpush1.bf16.msra.mxu0 %v1090
    %1112 = vmatprep.subr.bf16.mxu0 0
    %1113 = vmatpush1.bf16.msra.mxu0 %v1091
    %1114 = vmatprep.subr.bf16.mxu0 0
    %1115 = vmatpush1.bf16.msra.mxu0 %v1092
    %1116 = vmatprep.subr.bf16.mxu0 0
    %1117 = vmatpush1.bf16.msra.mxu0 %v1093
    %1118 = vmatprep.subr.bf16.mxu0 0
    %1119 = vmatpush1.bf16.msra.mxu0 0
    %1120 = vmatprep.subr.bf16.mxu0 0
    %1121 = vmatpush1.bf16.msra.mxu0 0
    %1122 = vmatprep.subr.bf16.mxu0 0
    %1123 = vmatpush1.bf16.msra.mxu0 0
    %1124 = vmatprep.subr.bf16.mxu0 0
    %1125 = vmatpush1.bf16.msra.mxu0 0
    %1126 = vmatprep.subr.bf16.mxu0 0
    %1127 = vmatpush1.bf16.msra.mxu0 0
    %1128 = vmatprep.subr.bf16.mxu0 0
    %1129 = vmatpush1.bf16.msra.mxu0 0
    %1130 = vmatprep.subr.bf16.mxu0 0
    %1131 = vmatpush1.bf16.msra.mxu0 0
    %1132 = vmatprep.subr.bf16.mxu0 0
    %1133 = vmatpush1.bf16.msra.mxu0 0
    %1134 = vmatprep.mubr.bf16.mxu0 0
    %1135 = vmatmul.mubr.bf16.gmra.mrb[0].mxu0 %v1031
    %v1136 = vpop.f32.mrb[0].mxu0
    %v1137 = vadd.f32 %v1053, %v1136
    %v1138 = vpop.f32.mrb[0].mxu0
    %v1139 = vpop.f32.mrb[0].mxu0
    %v1140 = vadd.f32 %v1053, %v1139
    %v1141 = vpop.f32.mrb[0].mxu0
    %1142 = vdwg.mxu0
    %v1143 = vmax.f32 %v1137, 0.0
    %v1144 = vmax.f32 %v1140, 0.0
    %v1145 = vpack.c.bf16 %v1144, %v1143
    %s1146 = scalar_lea.vmem [#allocation7], 256
    %v1147 = vld [vmem:[%s1146] sm:$0xf]
    %v1148 = vld [vmem:[%s1146 + $0x4] sm:$0xf]
    %v1149 = vld [vmem:[%s1146 + $0x8] sm:$0xf]
    %v1150 = vld [vmem:[%s1146 + $0xc] sm:$0xf]
    %v1151 = vld [vmem:[%s1146 + $0x10] sm:$0xf]
    %v1152 = vld [vmem:[%s1146 + $0x14] sm:$0xf]
    %v1153 = vld [vmem:[%s1146 + $0x18] sm:$0xf]
    %v1154 = vld [vmem:[%s1146 + $0x1c] sm:$0xf]
    %v1155 = vld [vmem:[%s1146 + $0x20] sm:$0xf]
    %v1156 = vld [vmem:[%s1146 + $0x24] sm:$0xf]
    %v1157 = vld [vmem:[%s1146 + $0x28] sm:$0xf]
    %v1158 = vld [vmem:[%s1146 + $0x2c] sm:$0xf]
    %v1159 = vld [vmem:[%s1146 + $0x30] sm:$0xf]
    %v1160 = vld [vmem:[%s1146 + $0x34] sm:$0xf]
    %v1161 = vld [vmem:[%s1146 + $0x38] sm:$0xf]
    %v1162 = vld [vmem:[%s1146 + $0x3c] sm:$0xf]
    %v1163 = vld [vmem:[%s3 + $0x5] sm:$0x1]
    %v1164 = vlaneseq
    %v1165 = vshrl.u32 %v1164, 7
    %v1166 = vsub.s32 0, %v1165
    %v1167 = vrot.slane %v1163, %v1166
    %v1184 = vunpack.c.l.b16 %v1147
    %v1185 = vunpack.c.l.b16 %v1148
    %v1186 = vunpack.c.l.b16 %v1149
    %v1187 = vunpack.c.l.b16 %v1150
    %v1188 = vunpack.c.l.b16 %v1151
    %v1189 = vunpack.c.l.b16 %v1152
    %v1190 = vunpack.c.l.b16 %v1153
    %v1191 = vunpack.c.l.b16 %v1154
    %v1192 = vunpack.c.l.b16 %v1155
    %v1193 = vunpack.c.l.b16 %v1156
    %v1194 = vunpack.c.l.b16 %v1157
    %v1195 = vunpack.c.l.b16 %v1158
    %v1196 = vunpack.c.l.b16 %v1159
    %v1197 = vunpack.c.l.b16 %v1160
    %v1198 = vunpack.c.l.b16 %v1161
    %v1199 = vunpack.c.l.b16 %v1162
    %v1200 = vpack.c.b16 %v1185, %v1184
    %v1201 = vpack.c.b16 %v1187, %v1186
    %v1202 = vpack.c.b16 %v1189, %v1188
    %v1203 = vpack.c.b16 %v1191, %v1190
    %v1204 = vpack.c.b16 %v1193, %v1192
    %v1205 = vpack.c.b16 %v1195, %v1194
    %v1206 = vpack.c.b16 %v1197, %v1196
    %v1207 = vpack.c.b16 %v1199, %v1198
    %1216 = vmatprep.subr.bf16.mxu0 0
    %1217 = vmatpush1.bf16.msra.mxu0 %v1200
    %1218 = vmatprep.subr.bf16.mxu0 0
    %1219 = vmatpush1.bf16.msra.mxu0 %v1201
    %1220 = vmatprep.subr.bf16.mxu0 0
    %1221 = vmatpush1.bf16.msra.mxu0 %v1202
    %1222 = vmatprep.subr.bf16.mxu0 0
    %1223 = vmatpush1.bf16.msra.mxu0 %v1203
    %1224 = vmatprep.subr.bf16.mxu0 0
    %1225 = vmatpush1.bf16.msra.mxu0 %v1204
    %1226 = vmatprep.subr.bf16.mxu0 0
    %1227 = vmatpush1.bf16.msra.mxu0 %v1205
    %1228 = vmatprep.subr.bf16.mxu0 0
    %1229 = vmatpush1.bf16.msra.mxu0 %v1206
    %1230 = vmatprep.subr.bf16.mxu0 0
    %1231 = vmatpush1.bf16.msra.mxu0 %v1207
    %1232 = vmatprep.subr.bf16.mxu0 0
    %1233 = vmatpush1.bf16.msra.mxu0 0
    %1234 = vmatprep.subr.bf16.mxu0 0
    %1235 = vmatpush1.bf16.msra.mxu0 0
    %1236 = vmatprep.subr.bf16.mxu0 0
    %1237 = vmatpush1.bf16.msra.mxu0 0
    %1238 = vmatprep.subr.bf16.mxu0 0
    %1239 = vmatpush1.bf16.msra.mxu0 0
    %1240 = vmatprep.subr.bf16.mxu0 0
    %1241 = vmatpush1.bf16.msra.mxu0 0
    %1242 = vmatprep.subr.bf16.mxu0 0
    %1243 = vmatpush1.bf16.msra.mxu0 0
    %1244 = vmatprep.subr.bf16.mxu0 0
    %1245 = vmatpush1.bf16.msra.mxu0 0
    %1246 = vmatprep.subr.bf16.mxu0 0
    %1247 = vmatpush1.bf16.msra.mxu0 0
    %1248 = vmatprep.mubr.bf16.mxu0 0
    %1249 = vmatmul.mubr.bf16.gmra.mrb[0].mxu0 %v1145
    %v1250 = vpop.f32.mrb[0].mxu0
    %v1251 = vadd.f32 %v1167, %v1250
    %v1252 = vpop.f32.mrb[0].mxu0
    %v1253 = vpop.f32.mrb[0].mxu0
    %v1254 = vadd.f32 %v1167, %v1253
    %v1255 = vpop.f32.mrb[0].mxu0
    %1256 = vdwg.mxu0
    %v1257 = vmax.f32 %v1251, 0.0
    %v1258 = vmax.f32 %v1254, 0.0
    %v1259 = vpack.c.bf16 %v1258, %v1257
    %s1260 = scalar_lea.vmem [#allocation7], 320
    %v1261 = vld [vmem:[%s1260] sm:$0xf]
    %v1262 = vld [vmem:[%s1260 + $0x4] sm:$0xf]
    %v1263 = vld [vmem:[%s1260 + $0x8] sm:$0xf]
    %v1264 = vld [vmem:[%s1260 + $0xc] sm:$0xf]
    %v1265 = vld [vmem:[%s1260 + $0x10] sm:$0xf]
    %v1266 = vld [vmem:[%s1260 + $0x14] sm:$0xf]
    %v1267 = vld [vmem:[%s1260 + $0x18] sm:$0xf]
    %v1268 = vld [vmem:[%s1260 + $0x1c] sm:$0xf]
    %v1269 = vld [vmem:[%s1260 + $0x20] sm:$0xf]
    %v1270 = vld [vmem:[%s1260 + $0x24] sm:$0xf]
    %v1271 = vld [vmem:[%s1260 + $0x28] sm:$0xf]
    %v1272 = vld [vmem:[%s1260 + $0x2c] sm:$0xf]
    %v1273 = vld [vmem:[%s1260 + $0x30] sm:$0xf]
    %v1274 = vld [vmem:[%s1260 + $0x34] sm:$0xf]
    %v1275 = vld [vmem:[%s1260 + $0x38] sm:$0xf]
    %v1276 = vld [vmem:[%s1260 + $0x3c] sm:$0xf]
    %v1277 = vld [vmem:[%s3 + $0x6] sm:$0x1]
    %v1278 = vlaneseq
    %v1279 = vshrl.u32 %v1278, 7
    %v1280 = vsub.s32 0, %v1279
    %v1281 = vrot.slane %v1277, %v1280
    %v1298 = vunpack.c.l.b16 %v1261
    %v1299 = vunpack.c.l.b16 %v1262
    %v1300 = vunpack.c.l.b16 %v1263
    %v1301 = vunpack.c.l.b16 %v1264
    %v1302 = vunpack.c.l.b16 %v1265
    %v1303 = vunpack.c.l.b16 %v1266
    %v1304 = vunpack.c.l.b16 %v1267
    %v1305 = vunpack.c.l.b16 %v1268
    %v1306 = vunpack.c.l.b16 %v1269
    %v1307 = vunpack.c.l.b16 %v1270
    %v1308 = vunpack.c.l.b16 %v1271
    %v1309 = vunpack.c.l.b16 %v1272
    %v1310 = vunpack.c.l.b16 %v1273
    %v1311 = vunpack.c.l.b16 %v1274
    %v1312 = vunpack.c.l.b16 %v1275
    %v1313 = vunpack.c.l.b16 %v1276
    %v1314 = vpack.c.b16 %v1299, %v1298
    %v1315 = vpack.c.b16 %v1301, %v1300
    %v1316 = vpack.c.b16 %v1303, %v1302
    %v1317 = vpack.c.b16 %v1305, %v1304
    %v1318 = vpack.c.b16 %v1307, %v1306
    %v1319 = vpack.c.b16 %v1309, %v1308
    %v1320 = vpack.c.b16 %v1311, %v1310
    %v1321 = vpack.c.b16 %v1313, %v1312
    %1330 = vmatprep.subr.bf16.mxu0 0
    %1331 = vmatpush1.bf16.msra.mxu0 %v1314
    %1332 = vmatprep.subr.bf16.mxu0 0
    %1333 = vmatpush1.bf16.msra.mxu0 %v1315
    %1334 = vmatprep.subr.bf16.mxu0 0
    %1335 = vmatpush1.bf16.msra.mxu0 %v1316
    %1336 = vmatprep.subr.bf16.mxu0 0
    %1337 = vmatpush1.bf16.msra.mxu0 %v1317
    %1338 = vmatprep.subr.bf16.mxu0 0
    %1339 = vmatpush1.bf16.msra.mxu0 %v1318
    %1340 = vmatprep.subr.bf16.mxu0 0
    %1341 = vmatpush1.bf16.msra.mxu0 %v1319
    %1342 = vmatprep.subr.bf16.mxu0 0
    %1343 = vmatpush1.bf16.msra.mxu0 %v1320
    %1344 = vmatprep.subr.bf16.mxu0 0
    %1345 = vmatpush1.bf16.msra.mxu0 %v1321
    %1346 = vmatprep.subr.bf16.mxu0 0
    %1347 = vmatpush1.bf16.msra.mxu0 0
    %1348 = vmatprep.subr.bf16.mxu0 0
    %1349 = vmatpush1.bf16.msra.mxu0 0
    %1350 = vmatprep.subr.bf16.mxu0 0
    %1351 = vmatpush1.bf16.msra.mxu0 0
    %1352 = vmatprep.subr.bf16.mxu0 0
    %1353 = vmatpush1.bf16.msra.mxu0 0
    %1354 = vmatprep.subr.bf16.mxu0 0
    %1355 = vmatpush1.bf16.msra.mxu0 0
    %1356 = vmatprep.subr.bf16.mxu0 0
    %1357 = vmatpush1.bf16.msra.mxu0 0
    %1358 = vmatprep.subr.bf16.mxu0 0
    %1359 = vmatpush1.bf16.msra.mxu0 0
    %1360 = vmatprep.subr.bf16.mxu0 0
    %1361 = vmatpush1.bf16.msra.mxu0 0
    %1362 = vmatprep.mubr.bf16.mxu0 0
    %1363 = vmatmul.mubr.bf16.gmra.mrb[0].mxu0 %v1259
    %v1364 = vpop.f32.mrb[0].mxu0
    %v1365 = vadd.f32 %v1281, %v1364
    %v1366 = vpop.f32.mrb[0].mxu0
    %v1367 = vpop.f32.mrb[0].mxu0
    %v1368 = vadd.f32 %v1281, %v1367
    %v1369 = vpop.f32.mrb[0].mxu0
    %1370 = vdwg.mxu0
    %v1371 = vmax.f32 %v1365, 0.0
    %v1372 = vmax.f32 %v1368, 0.0
    %v1373 = vpack.c.bf16 %v1372, %v1371
    %v1374 = vld [vmem:[#allocation8] sm:$0xf]
    %v1375 = vld [vmem:[#allocation8 + $0x4] sm:$0xf]
    %v1376 = vld [vmem:[#allocation8 + $0x8] sm:$0xf]
    %v1377 = vld [vmem:[#allocation8 + $0xc] sm:$0xf]
    %v1378 = vld [vmem:[#allocation8 + $0x10] sm:$0xf]
    %v1379 = vld [vmem:[#allocation8 + $0x14] sm:$0xf]
    %v1380 = vld [vmem:[#allocation8 + $0x18] sm:$0xf]
    %v1381 = vld [vmem:[#allocation8 + $0x1c] sm:$0xf]
    %v1382 = vld [vmem:[#allocation8 + $0x20] sm:$0xf]
    %v1383 = vld [vmem:[#allocation8 + $0x24] sm:$0xf]
    %v1384 = vld [vmem:[#allocation8 + $0x28] sm:$0xf]
    %v1385 = vld [vmem:[#allocation8 + $0x2c] sm:$0xf]
    %v1386 = vld [vmem:[#allocation8 + $0x30] sm:$0xf]
    %v1387 = vld [vmem:[#allocation8 + $0x34] sm:$0xf]
    %v1388 = vld [vmem:[#allocation8 + $0x38] sm:$0xf]
    %v1389 = vld [vmem:[#allocation8 + $0x3c] sm:$0xf]
    %v1390 = vld [vmem:[%s5] sm:$0x1]
    %v1392 = vlaneseq
    %v1393 = vshrl.u32 %v1392, 7
    %v1394 = vsub.s32 0, %v1393
    %v1395 = vrot.slane %v1390, %v1394
    %v1413 = vunpack.c.l.b16 %v1374
    %v1414 = vunpack.c.l.b16 %v1375
    %v1415 = vunpack.c.l.b16 %v1376
    %v1416 = vunpack.c.l.b16 %v1377
    %v1417 = vunpack.c.l.b16 %v1378
    %v1418 = vunpack.c.l.b16 %v1379
    %v1419 = vunpack.c.l.b16 %v1380
    %v1420 = vunpack.c.l.b16 %v1381
    %v1421 = vunpack.c.l.b16 %v1382
    %v1422 = vunpack.c.l.b16 %v1383
    %v1423 = vunpack.c.l.b16 %v1384
    %v1424 = vunpack.c.l.b16 %v1385
    %v1425 = vunpack.c.l.b16 %v1386
    %v1426 = vunpack.c.l.b16 %v1387
    %v1427 = vunpack.c.l.b16 %v1388
    %v1428 = vunpack.c.l.b16 %v1389
    %v1429 = vpack.c.b16 %v1414, %v1413
    %v1430 = vpack.c.b16 %v1416, %v1415
    %v1431 = vpack.c.b16 %v1418, %v1417
    %v1432 = vpack.c.b16 %v1420, %v1419
    %v1433 = vpack.c.b16 %v1422, %v1421
    %v1434 = vpack.c.b16 %v1424, %v1423
    %v1435 = vpack.c.b16 %v1426, %v1425
    %v1436 = vpack.c.b16 %v1428, %v1427
    %1445 = vmatprep.subr.bf16.mxu0 0
    %1446 = vmatpush1.bf16.msra.mxu0 %v1429
    %1447 = vmatprep.subr.bf16.mxu0 0
    %1448 = vmatpush1.bf16.msra.mxu0 %v1430
    %1449 = vmatprep.subr.bf16.mxu0 0
    %1450 = vmatpush1.bf16.msra.mxu0 %v1431
    %1451 = vmatprep.subr.bf16.mxu0 0
    %1452 = vmatpush1.bf16.msra.mxu0 %v1432
    %1453 = vmatprep.subr.bf16.mxu0 0
    %1454 = vmatpush1.bf16.msra.mxu0 %v1433
    %1455 = vmatprep.subr.bf16.mxu0 0
    %1456 = vmatpush1.bf16.msra.mxu0 %v1434
    %1457 = vmatprep.subr.bf16.mxu0 0
    %1458 = vmatpush1.bf16.msra.mxu0 %v1435
    %1459 = vmatprep.subr.bf16.mxu0 0
    %1460 = vmatpush1.bf16.msra.mxu0 %v1436
    %1461 = vmatprep.subr.bf16.mxu0 0
    %1462 = vmatpush1.bf16.msra.mxu0 0
    %1463 = vmatprep.subr.bf16.mxu0 0
    %1464 = vmatpush1.bf16.msra.mxu0 0
    %1465 = vmatprep.subr.bf16.mxu0 0
    %1466 = vmatpush1.bf16.msra.mxu0 0
    %1467 = vmatprep.subr.bf16.mxu0 0
    %1468 = vmatpush1.bf16.msra.mxu0 0
    %1469 = vmatprep.subr.bf16.mxu0 0
    %1470 = vmatpush1.bf16.msra.mxu0 0
    %1471 = vmatprep.subr.bf16.mxu0 0
    %1472 = vmatpush1.bf16.msra.mxu0 0
    %1473 = vmatprep.subr.bf16.mxu0 0
    %1474 = vmatpush1.bf16.msra.mxu0 0
    %1475 = vmatprep.subr.bf16.mxu0 0
    %1476 = vmatpush1.bf16.msra.mxu0 0
    %1477 = vmatprep.mubr.bf16.mxu0 0
    %1478 = vmatmul.mubr.bf16.gmra.mrb[0].mxu0 %v1373
    %v1479 = vpop.f32.mrb[0].mxu0
    %v1480 = vadd.f32 %v1395, %v1479
    %v1481 = vpop.f32.mrb[0].mxu0
    %v1482 = vpop.f32.mrb[0].mxu0
    %v1483 = vadd.f32 %v1395, %v1482
    %v1484 = vpop.f32.mrb[0].mxu0
    %1485 = vdwg.mxu0
    %1486 = vst [vmem:[#allocation10] sm:$0xff] %v1480
    %1487 = vst [vmem:[#allocation10 + $0x8] sm:$0xff] %v1483
    // Predicated region
    $region42: #{tpu_custom_call.1} parent=1 // pred_check
      _
    $region43: #{tpu_custom_call.1} parent=1 // pred_check_branch
      %1489 = sbr.rel (0) target = $region45
    $region44: #{tpu_custom_call.1} parent=1 // pred_region
      %s1491 = ssub.s32 256, 256
      %1492 = vsyncadd [#allocation4], %s1491
      %s1493 = sshll.u32 [#allocation10], 4
      %s1494 = int_to_ptr.vmem [resolvable:$true] %s1493
      %1499 = dma.vmem_to_hbm [thread:$0]  %s1494, 256, %s6, [#allocation4], 128, 128, 8
    $region45: #{tpu_custom_call.1} parent=1 // pred_fallthru
      _
    // Predicated region
    $region46: #{tpu_custom_call.1} parent=1 // pred_check
      _
    $region47: #{tpu_custom_call.1} parent=1 // pred_check_branch
      %1501 = sbr.rel (0) target = $region49
    $region48: #{tpu_custom_call.1} parent=1 // pred_region
      %1502 = dma.done [#allocation4], 256
    $region49: #{tpu_custom_call.1} parent=1 // pred_fallthru
      _
    %1503 = vsyncpa [#allocation3], 1
    %1504 = vsyncpa [#allocation6], 1
    %1505 = vsyncpa [#allocation9], 1
    %1506 = vsyncpa [#allocation4], 1

</llo_original>
